<compile_context>
chip_gen: v5e
topology: v5e:2x2
jax: 0.10.0
libtpu: 0.0.40
codegen_flags: <defaults>
</compile_context>

<pallas_src>
import functools

import jax
import jax.numpy as jnp
from jax import lax
from jax.experimental import pallas as pl
from jax.experimental.pallas import tpu as pltpu


# ----------------------------- kernel ---------------------------------------


def _sdpa_kernel(q_ref, k_ref, v_ref, ctx_ref, attn_ref, *, scale, mxu_dtype):
    q = q_ref[...]                                   # (Bt, tq, Dk)
    if scale is not None:
        # Fold the scalar into Q once: O(tq*Dk) VPU work instead of O(tq*Lk).
        q = q * scale
    k = k_ref[...]                                   # (Bt, Lk, Dk)

    # Batched Q @ K^T without an explicit transpose: contract last dims,
    # batch over dim 0.  bf16 operands, f32 accumulate.  -> (Bt, tq, Lk)
    s = lax.dot_general(
        q.astype(mxu_dtype), k.astype(mxu_dtype),
        dimension_numbers=(((2,), (2,)), ((0,), (0,))),
        preferred_element_type=jnp.float32)

    # Numerically-stable softmax over the key axis; f32 VPU/EUP math.
    s_max = jnp.max(s, axis=-1, keepdims=True)
    e = jnp.exp(s - s_max)
    inv = pl.reciprocal(jnp.sum(e, axis=-1, keepdims=True), approx=True)
    attn = e * inv
    attn_ref[...] = attn.astype(attn_ref.dtype)      # f32 attn out (module API)

    # Batched attention @ V: contract attn's key axis with V's key axis.
    ctx = lax.dot_general(
        attn.astype(mxu_dtype), v_ref[...].astype(mxu_dtype),
        dimension_numbers=(((2,), (1,)), ((0,), (0,))),
        preferred_element_type=jnp.float32)
    ctx_ref[...] = ctx.astype(ctx_ref.dtype)


# ----------------------------- tiling heuristics ----------------------------

_VMEM_BLOCK_BUDGET = 16 * 1024 * 1024   # double-buffered block footprint target
_VMEM_LIMIT = 48 * 1024 * 1024          # scoped VMEM: > 16/32 MiB defaults, < v7x 64 MiB


def _pick_tq(Lq, target=256):
    """Largest multiple of 8 <= target that divides Lq (else full Lq)."""
    if Lq <= target:
        return Lq
    t = (min(target, Lq) // 8) * 8
    while t >= 8:
        if Lq % t == 0:
            return t
        t -= 8
    return Lq


def _pick_bt(B, nq, per_elem_bytes, budget_bytes):
    """Largest divisor of B fitting the VMEM budget while keeping >=4 grid steps."""
    want_nb = -(-4 // max(1, nq))            # batch tiles needed for >=4 steps
    cap = max(1, B // max(1, want_nb))
    best = 1
    for bt in range(1, cap + 1):
        if B % bt == 0 and bt * per_elem_bytes <= budget_bytes:
            best = bt
    return best


# ----------------------------- wrapper ---------------------------------------


def scaled_dot_product_attention(Q, K, V, scale=None, *,
                                 mxu_dtype=jnp.bfloat16, tq_target=256):
    """Q: [B, Lq, Dk], K: [B, Lk, Dk], V: [B, Lk, Dv] -> (context, attention)."""
    B, Lq, Dk = Q.shape
    _, Lk, _ = K.shape
    _, _, Dv = V.shape
    out_dtype = Q.dtype

    # PyTorch uses `if scale:` (falsy 0/None means no scaling).
    scale = float(scale) if scale else None

    tq = _pick_tq(Lq, tq_target)
    nq = Lq // tq
    # Double-buffered f32 footprint per batch element per grid step.
    per_elem = 2 * 4 * (tq * Dk + Lk * Dk + Lk * Dv + tq * Dv + tq * Lk)
    Bt = _pick_bt(B, nq, per_elem, _VMEM_BLOCK_BUDGET)
    nb = B // Bt

    kern = functools.partial(_sdpa_kernel, scale=scale, mxu_dtype=mxu_dtype)

    cost = pl.CostEstimate(
        flops=2 * B * Lq * Lk * (Dk + Dv),
        transcendentals=B * Lq * Lk,
        bytes_accessed=4 * B * (Lq * Dk + Lk * Dk + Lk * Dv + Lq * Dv + Lq * Lk),
    )

    ctx, attn = pl.pallas_call(
        kern,
        grid=(nb, nq),                       # q axis innermost -> K/V stay resident
        in_specs=[
            pl.BlockSpec((Bt, tq, Dk), lambda b, qi: (b, qi, 0)),   # Q
            pl.BlockSpec((Bt, Lk, Dk), lambda b, qi: (b, 0, 0)),    # K (q-invariant)
            pl.BlockSpec((Bt, Lk, Dv), lambda b, qi: (b, 0, 0)),    # V (q-invariant)
        ],
        out_specs=(
            pl.BlockSpec((Bt, tq, Dv), lambda b, qi: (b, qi, 0)),   # context
            pl.BlockSpec((Bt, tq, Lk), lambda b, qi: (b, qi, 0)),   # attention
        ),
        out_shape=(
            jax.ShapeDtypeStruct((B, Lq, Dv), out_dtype),
            jax.ShapeDtypeStruct((B, Lq, Lk), out_dtype),
        ),
        compiler_params=pltpu.CompilerParams(
            dimension_semantics=("parallel", "parallel"),
            vmem_limit_bytes=_VMEM_LIMIT),
        cost_estimate=cost,
    )(Q, K, V)
    return ctx, attn


# ----------------------------- pure-JAX reference ---------------------------


def sdpa_reference(Q, K, V, scale=None):
    s = jnp.einsum("bld,bmd->blm", Q, K)
    if scale:
        s = s * scale
    attn = jax.nn.softmax(s, axis=-1)
    ctx = jnp.einsum("blm,bmd->bld", attn, V)
    return ctx, attn


# ----------------------------- main ------------------------------------------


if __name__ == "__main__":
    # Small but lane-dense shapes (last dims are multiples of 128): 8 batch
    # slots, seq 128, feature dim 128.
    B, L, D = 8, 128, 128

    key = jax.random.PRNGKey(0)
    kq, kk, kv = jax.random.split(key, 3)
    Q = jax.random.normal(kq, (B, L, D), jnp.float32)
    K = jax.random.normal(kk, (B, L, D), jnp.float32)
    V = jax.random.normal(kv, (B, L, D), jnp.float32)
    scale = float(D) ** -0.5

    # Default path: bf16 MXU operands, scaled attention.  Tolerances are
    # loosened to account for the bf16 matmul operands + approx reciprocal.
    ctx, attn = scaled_dot_product_attention(Q, K, V, scale)
    jax.block_until_ready((ctx, attn))
    ctx_ref, attn_ref = sdpa_reference(Q, K, V, scale)
    assert ctx.shape == (B, L, D) and attn.shape == (B, L, L)
    assert jnp.allclose(attn, attn_ref, atol=3e-2, rtol=3e-2)
    assert jnp.allclose(ctx, ctx_ref, atol=3e-2, rtol=3e-2)
    assert jnp.allclose(jnp.sum(attn, axis=-1), 1.0, atol=5e-3)

    # Full-precision MXU path, unscaled branch (module's `scale=None`):
    # tight tolerances against the f32 reference.
    ctx2, attn2 = scaled_dot_product_attention(Q, K, V, None,
                                               mxu_dtype=jnp.float32)
    jax.block_until_ready((ctx2, attn2))
    ctx2_ref, attn2_ref = sdpa_reference(Q, K, V, None)
    assert jnp.allclose(attn2, attn2_ref, atol=5e-3, rtol=5e-3)
    assert jnp.allclose(ctx2, ctx2_ref, atol=5e-3, rtol=5e-3)

    print("KERNEL_OK")
</pallas_src>

<mosaic_0001>
module attributes {stable_mosaic.version = 11 : i64} {
  func.func @_sdpa_kernel(%arg0: i32, %arg1: i32, %arg2: memref<2x128x128xf32, #tpu.memory_space<vmem>>, %arg3: memref<2x128x128xf32, #tpu.memory_space<vmem>>, %arg4: memref<2x128x128xf32, #tpu.memory_space<vmem>>, %arg5: memref<2x128x128xf32, #tpu.memory_space<vmem>>, %arg6: memref<2x128x128xf32, #tpu.memory_space<vmem>>) attributes {dimension_semantics = [#tpu.dimension_semantics<parallel>, #tpu.dimension_semantics<parallel>], iteration_bounds = array<i64: 4, 1>, scalar_prefetch = 0 : i64, scratch_operands = 0 : i64, tpu.core_type = #tpu.core_type<tc>, window_params = [{transform_indices = @transform_0, window_bounds = array<i64: 2, 128, 128>}, {transform_indices = @transform_1, window_bounds = array<i64: 2, 128, 128>}, {transform_indices = @transform_2, window_bounds = array<i64: 2, 128, 128>}, {transform_indices = @transform_3, window_bounds = array<i64: 2, 128, 128>}, {transform_indices = @transform_4, window_bounds = array<i64: 2, 128, 128>}]} {
    %c0 = arith.constant 0 : index
    %c0_0 = arith.constant 0 : index
    %c0_1 = arith.constant 0 : index
    %0 = vector.load %arg2[%c0, %c0_0, %c0_1] : memref<2x128x128xf32, #tpu.memory_space<vmem>>, vector<2x128x128xf32>
    %cst = arith.constant 0.0883883461 : f32
    %1 = vector.broadcast %cst : f32 to vector<2x128x128xf32>
    %2 = arith.mulf %0, %1 : vector<2x128x128xf32>
    %c0_2 = arith.constant 0 : index
    %c0_3 = arith.constant 0 : index
    %c0_4 = arith.constant 0 : index
    %3 = vector.load %arg3[%c0_2, %c0_3, %c0_4] : memref<2x128x128xf32, #tpu.memory_space<vmem>>, vector<2x128x128xf32>
    %4 = arith.truncf %2 : vector<2x128x128xf32> to vector<2x128x128xbf16>
    %5 = arith.truncf %3 : vector<2x128x128xf32> to vector<2x128x128xbf16>
    %cst_5 = arith.constant dense<0.000000e+00> : vector<2x128x128xf32>
    %6 = tpu.matmul %4, %5, %cst_5 {dimension_numbers = #tpu.dot_dimension_numbers<[2], [2], [1], [1], [0, 0, 0, 1, 1, 1], [0], [0]>} : vector<2x128x128xbf16>, vector<2x128x128xbf16>, vector<2x128x128xf32> -> vector<2x128x128xf32>
    %cst_6 = arith.constant dense<0xFF800000> : vector<2x128xf32>
    %7 = vector.multi_reduction <maximumf>, %6, %cst_6 [2] : vector<2x128x128xf32> to vector<2x128xf32>
    %8 = vector.shape_cast %7 : vector<2x128xf32> to vector<2x128x1xf32>
    %9 = vector.broadcast %8 : vector<2x128x1xf32> to vector<2x128x128xf32>
    %10 = arith.subf %6, %9 : vector<2x128x128xf32>
    %11 = math.exp %10 : vector<2x128x128xf32>
    %cst_7 = arith.constant dense<0.000000e+00> : vector<2x128xf32>
    %12 = vector.multi_reduction <add>, %11, %cst_7 [2] : vector<2x128x128xf32> to vector<2x128xf32>
    %13 = vector.shape_cast %12 : vector<2x128xf32> to vector<2x128x1xf32>
    %14 = tpu.reciprocal %13 {approx = true} : vector<2x128x1xf32> -> vector<2x128x1xf32>
    %15 = vector.broadcast %14 : vector<2x128x1xf32> to vector<2x128x128xf32>
    %16 = arith.mulf %11, %15 : vector<2x128x128xf32>
    %c0_8 = arith.constant 0 : index
    %c0_9 = arith.constant 0 : index
    %c0_10 = arith.constant 0 : index
    %17 = vector.load %arg6[%c0_8, %c0_9, %c0_10] : memref<2x128x128xf32, #tpu.memory_space<vmem>>, vector<2x128x128xf32>
    tpu.vector_store %arg6[%c0_8, %c0_9, %c0_10], %16 {strides = array<i32>} : memref<2x128x128xf32, #tpu.memory_space<vmem>>, vector<2x128x128xf32>,
    %18 = arith.truncf %16 : vector<2x128x128xf32> to vector<2x128x128xbf16>
    %c0_11 = arith.constant 0 : index
    %c0_12 = arith.constant 0 : index
    %c0_13 = arith.constant 0 : index
    %19 = vector.load %arg4[%c0_11, %c0_12, %c0_13] : memref<2x128x128xf32, #tpu.memory_space<vmem>>, vector<2x128x128xf32>
    %20 = arith.truncf %19 : vector<2x128x128xf32> to vector<2x128x128xbf16>
    %cst_14 = arith.constant dense<0.000000e+00> : vector<2x128x128xf32>
    %21 = tpu.matmul %18, %20, %cst_14 {dimension_numbers = #tpu.dot_dimension_numbers<[2], [1], [1], [2], [0, 0, 0, 1, 1, 2], [0], [0]>} : vector<2x128x128xbf16>, vector<2x128x128xbf16>, vector<2x128x128xf32> -> vector<2x128x128xf32>
    %c0_15 = arith.constant 0 : index
    %c0_16 = arith.constant 0 : index
    %c0_17 = arith.constant 0 : index
    %22 = vector.load %arg5[%c0_15, %c0_16, %c0_17] : memref<2x128x128xf32, #tpu.memory_space<vmem>>, vector<2x128x128xf32>
    tpu.vector_store %arg5[%c0_15, %c0_16, %c0_17], %21 {strides = array<i32>} : memref<2x128x128xf32, #tpu.memory_space<vmem>>, vector<2x128x128xf32>,
    return
  }
  func.func @transform_0(%arg0: i32, %arg1: i32) -> (i32, i32, i32) {
    %c0_i32 = arith.constant 0 : i32
    %c0_i32_0 = arith.constant 0 : i32
    return %arg0, %arg1, %c0_i32 : i32, i32, i32
  }
  func.func @transform_1(%arg0: i32, %arg1: i32) -> (i32, i32, i32) {
    %c0_i32 = arith.constant 0 : i32
    %c0_i32_0 = arith.constant 0 : i32
    %c0_i32_1 = arith.constant 0 : i32
    return %arg0, %c0_i32, %c0_i32_0 : i32, i32, i32
  }
  func.func @transform_2(%arg0: i32, %arg1: i32) -> (i32, i32, i32) {
    %c0_i32 = arith.constant 0 : i32
    %c0_i32_0 = arith.constant 0 : i32
    %c0_i32_1 = arith.constant 0 : i32
    return %arg0, %c0_i32, %c0_i32_0 : i32, i32, i32
  }
  func.func @transform_3(%arg0: i32, %arg1: i32) -> (i32, i32, i32) {
    %c0_i32 = arith.constant 0 : i32
    %c0_i32_0 = arith.constant 0 : i32
    return %arg0, %arg1, %c0_i32 : i32, i32, i32
  }
  func.func @transform_4(%arg0: i32, %arg1: i32) -> (i32, i32, i32) {
    %c0_i32 = arith.constant 0 : i32
    %c0_i32_0 = arith.constant 0 : i32
    return %arg0, %arg1, %c0_i32 : i32, i32, i32
  }
}

</mosaic_0001>

<llo_original>
// kernel: tpu_custom_call.1
$region0: #{tpu_custom_call.1}
  #allocation0 [shape = 'u32[]', space=smem, size = 0x4, offset = 0x4, fixed_abs, tag = 'smem constant byte address 0x4 - core index']
  #allocation1 [shape = 'u32[72,128]{1,0:T(1,128)}', space=vmem, size = 0x9000, scoped, tag = 'internal scratch']
  %s0 = inlined_call_operand.hbm [shape: f32[8,128,128], index: 0, kind: input, shape index: {}]
  %s1 = inlined_call_operand.hbm [shape: f32[8,128,128], index: 1, kind: input, shape index: {}]
  %s2 = inlined_call_operand.hbm [shape: f32[8,128,128], index: 2, kind: input, shape index: {}]
  %s3 = inlined_call_operand.hbm [shape: f32[8,128,128], index: 3, kind: output, shape index: {0}]
  %s4 = inlined_call_operand.hbm [shape: f32[8,128,128], index: 4, kind: output, shape index: {1}]
  %5 = xla_tuple %s3, %s4
  %s6 = sld [smem:[#allocation0]]
  $region65: #{tpu_custom_call.1} parent=0
    _
  %s8 = ssub.s32 1, %s6
  %s9 = scalar_select 0, %s8, %s6
  $region1: #{tpu_custom_call.1} parent=0
    #allocation2 [shape = 'u8[262144]{0}', space=vmem, size = 0x40000, scoped, tag = 'input window, operand 0']
    #allocation3 [shape = 's32[2]{0}', space=sflag, size = 0x8, scoped, tag = 'scoped memory for tpu_custom_call.1']
    #allocation4 [shape = 's32[2]{0}', space=sflag, size = 0x8, scoped, tag = 'scoped memory for tpu_custom_call.1']
    #allocation5 [shape = 'u8[262144]{0}', space=vmem, size = 0x40000, scoped, tag = 'input window, operand 1']
    #allocation6 [shape = 's32[2]{0}', space=sflag, size = 0x8, scoped, tag = 'scoped memory for tpu_custom_call.1']
    #allocation7 [shape = 'u8[262144]{0}', space=vmem, size = 0x40000, scoped, tag = 'input window, operand 2']
    #allocation8 [shape = 'u8[262144]{0}', space=vmem, size = 0x40000, scoped, tag = 'output window, operand 0']
    #allocation9 [shape = 'u8[262144]{0}', space=vmem, size = 0x40000, scoped, tag = 'output window, operand 1']
    #allocation10 [shape = 's32[2]{0}', space=sflag, size = 0x8, scoped, tag = 'scoped memory for tpu_custom_call.1']
    %10 = vsyncpa [#allocation3], 0
    %s11 = scalar_lea.sflag [#allocation3], 1
    %12 = vsyncpa %s11, 0
    %13 = vsyncpa [#allocation6], 0
    %s14 = scalar_lea.sflag [#allocation6], 1
    %15 = vsyncpa %s14, 0
    %16 = vsyncpa [#allocation4], 0
    %s17 = scalar_lea.sflag [#allocation4], 1
    %18 = vsyncpa %s17, 0
    %19 = vsyncpa [#allocation10], 0
    %s20 = scalar_lea.sflag [#allocation10], 1
    %21 = vsyncpa %s20, 0
    loop: start=0, step=1, limit=6
    $region2: #{tpu_custom_call.1} parent=1 // loop_pre_header
      _
    $region3: #{tpu_custom_call.1} parent=1 // loop_header
      %s23 = sphi 0, %s27
      %p24 = scmp.ge.s32.totalorder %s23, 6
      %s30 = sphi 0, %s42
      %s31 = sphi 0, %s38
      %s32 = sphi 0, %s30
      %s33 = sphi 0, %s31
      %s34 = sphi 0, %s32
      %s35 = sphi 0, %s33
      %s47 = sphi 0, %s49
      %s50 = sphi 0, %s47
      %s51 = sphi 0, %s50
      %s67 = sphi 0, %s51
      %s73 = sphi 0, %s75
      %s76 = sphi 0, %s73
      %s77 = sphi 0, %s76
      %s93 = sphi 0, %s77
      %s99 = sphi 0, %s101
      %s102 = sphi 0, %s99
      %s103 = sphi 0, %s102
      %s119 = sphi 0, %s103
      %s127 = sphi 0, %s129
      %s130 = sphi 0, %s127
      %s131 = sphi 0, %s130
      %s147 = sphi 0, %s131
      %s155 = sphi 0, %s157
      %s158 = sphi 0, %s155
      %s159 = sphi 0, %s158
      %s175 = sphi 0, %s159
    $region4: #{tpu_custom_call.1} parent=1 // loop_header_branch
      %26 = sbr.rel (%p24) target = $region8
    $region5: #{tpu_custom_call.1} parent=1 // loop_body
      %s28 = ssub.s32 %s23, 1
      %s29 = ssub.s32 %s23, 2
      %s36 = sadd.s32 1, %s31
      %p37 = scmp.ge.s32.totalorder %s36, 1
      %s38 = scalar_select %p37, 0, %s36
      %s39 = sadd.s32 1, %s30
      %s40 = scalar_select %p37, %s39, %s30
      %p41 = scmp.ge.s32.totalorder %s40, 4
      %s42 = scalar_select %p41, 0, %s40
      %s43 = ssub.s32 %s30, %s42
      %s44 = ssub.s32 %s31, %s38
      %s45 = sor.u32 %s43, %s44
      %p46 = scmp.eq.s32.totalorder %s45, 0
      %s48 = sadd.s32 %s47, 1
      %s49 = scalar_select %p46, %s47, %s48
      %p52 = pneg %p46
      %p53 = scmp.eq.s32.totalorder %s23, 3
      %p54 = por %p52, %p53
      %p55 = scmp.ne.s32.totalorder %s47, %s50
      %p56 = scmp.eq.s32.totalorder %s23, 0
      %p57 = por %p55, %p56
      %p58 = scmp.ne.s32.totalorder %s47, %s50
      %p59 = scmp.eq.s32.totalorder %s28, 3
      %p60 = por %p58, %p59
      %p61 = scmp.ne.s32.totalorder %s50, %s51
      %p62 = scmp.eq.s32.totalorder %s28, 0
      %p63 = por %p61, %p62
      %p64 = scmp.ne.s32.totalorder %s50, %s51
      %p65 = scmp.eq.s32.totalorder %s29, 3
      %p66 = por %p64, %p65
      %p68 = scmp.ne.s32.totalorder %s51, %s67
      %p69 = scmp.eq.s32.totalorder %s29, 0
      %p70 = por %p68, %p69
      %s71 = ssub.s32 %s30, %s42
      %p72 = scmp.eq.s32.totalorder %s71, 0
      %s74 = sadd.s32 %s73, 1
      %s75 = scalar_select %p72, %s73, %s74
      %p78 = pneg %p72
      %p79 = scmp.eq.s32.totalorder %s23, 3
      %p80 = por %p78, %p79
      %p81 = scmp.ne.s32.totalorder %s73, %s76
      %p82 = scmp.eq.s32.totalorder %s23, 0
      %p83 = por %p81, %p82
      %p84 = scmp.ne.s32.totalorder %s73, %s76
      %p85 = scmp.eq.s32.totalorder %s28, 3
      %p86 = por %p84, %p85
      %p87 = scmp.ne.s32.totalorder %s76, %s77
      %p88 = scmp.eq.s32.totalorder %s28, 0
      %p89 = por %p87, %p88
      %p90 = scmp.ne.s32.totalorder %s76, %s77
      %p91 = scmp.eq.s32.totalorder %s29, 3
      %p92 = por %p90, %p91
      %p94 = scmp.ne.s32.totalorder %s77, %s93
      %p95 = scmp.eq.s32.totalorder %s29, 0
      %p96 = por %p94, %p95
      %s97 = ssub.s32 %s30, %s42
      %p98 = scmp.eq.s32.totalorder %s97, 0
      %s100 = sadd.s32 %s99, 1
      %s101 = scalar_select %p98, %s99, %s100
      %p104 = pneg %p98
      %p105 = scmp.eq.s32.totalorder %s23, 3
      %p106 = por %p104, %p105
      %p107 = scmp.ne.s32.totalorder %s99, %s102
      %p108 = scmp.eq.s32.totalorder %s23, 0
      %p109 = por %p107, %p108
      %p110 = scmp.ne.s32.totalorder %s99, %s102
      %p111 = scmp.eq.s32.totalorder %s28, 3
      %p112 = por %p110, %p111
      %p113 = scmp.ne.s32.totalorder %s102, %s103
      %p114 = scmp.eq.s32.totalorder %s28, 0
      %p115 = por %p113, %p114
      %p116 = scmp.ne.s32.totalorder %s102, %s103
      %p117 = scmp.eq.s32.totalorder %s29, 3
      %p118 = por %p116, %p117
      %p120 = scmp.ne.s32.totalorder %s103, %s119
      %p121 = scmp.eq.s32.totalorder %s29, 0
      %p122 = por %p120, %p121
      %s123 = ssub.s32 %s30, %s42
      %s124 = ssub.s32 %s31, %s38
      %s125 = sor.u32 %s123, %s124
      %p126 = scmp.eq.s32.totalorder %s125, 0
      %s128 = sadd.s32 %s127, 1
      %s129 = scalar_select %p126, %s127, %s128
      %p132 = pneg %p126
      %p133 = scmp.eq.s32.totalorder %s23, 3
      %p134 = por %p132, %p133
      %p135 = scmp.ne.s32.totalorder %s127, %s130
      %p136 = scmp.eq.s32.totalorder %s23, 0
      %p137 = por %p135, %p136
      %p138 = scmp.ne.s32.totalorder %s127, %s130
      %p139 = scmp.eq.s32.totalorder %s28, 3
      %p140 = por %p138, %p139
      %p141 = scmp.ne.s32.totalorder %s130, %s131
      %p142 = scmp.eq.s32.totalorder %s28, 0
      %p143 = por %p141, %p142
      %p144 = scmp.ne.s32.totalorder %s130, %s131
      %p145 = scmp.eq.s32.totalorder %s29, 3
      %p146 = por %p144, %p145
      %p148 = scmp.ne.s32.totalorder %s131, %s147
      %p149 = scmp.eq.s32.totalorder %s29, 0
      %p150 = por %p148, %p149
      %s151 = ssub.s32 %s30, %s42
      %s152 = ssub.s32 %s31, %s38
      %s153 = sor.u32 %s151, %s152
      %p154 = scmp.eq.s32.totalorder %s153, 0
      %s156 = sadd.s32 %s155, 1
      %s157 = scalar_select %p154, %s155, %s156
      %p160 = pneg %p154
      %p161 = scmp.eq.s32.totalorder %s23, 3
      %p162 = por %p160, %p161
      %p163 = scmp.ne.s32.totalorder %s155, %s158
      %p164 = scmp.eq.s32.totalorder %s23, 0
      %p165 = por %p163, %p164
      %p166 = scmp.ne.s32.totalorder %s155, %s158
      %p167 = scmp.eq.s32.totalorder %s28, 3
      %p168 = por %p166, %p167
      %p169 = scmp.ne.s32.totalorder %s158, %s159
      %p170 = scmp.eq.s32.totalorder %s28, 0
      %p171 = por %p169, %p170
      %p172 = scmp.ne.s32.totalorder %s158, %s159
      %p173 = scmp.eq.s32.totalorder %s29, 3
      %p174 = por %p172, %p173
      %p176 = scmp.ne.s32.totalorder %s159, %s175
      %p177 = scmp.eq.s32.totalorder %s29, 0
      %p178 = por %p176, %p177
      %p179 = scmp.le.s32.totalorder 1, %s23
      %p180 = scmp.lt.s32.totalorder %s23, 5
      %p181 = pnand %p179, %p180
      %p182 = pneg %p181
      // Predicated region
      $region9: #{tpu_custom_call.1} parent=5 // pred_check
        _
      $region10: #{tpu_custom_call.1} parent=5 // pred_check_branch
        %184 = sbr.rel (%p181) target = $region12
      $region11: #{tpu_custom_call.1} parent=5 // pred_region
        %s185 = ssub.s32 %s23, 1
      $region12: #{tpu_custom_call.1} parent=5 // pred_fallthru
        _
      %p186 = scmp.lt.s32.totalorder %s23, 4
      // Predicated region
      $region13: #{tpu_custom_call.1} parent=5 // pred_check
        %p187 = pneg %p186
      $region14: #{tpu_custom_call.1} parent=5 // pred_check_branch
        %189 = sbr.rel (%p187) target = $region16
      $region15: #{tpu_custom_call.1} parent=5 // pred_region
        // Predicated region
        $region17: #{tpu_custom_call.1} parent=15 // pred_check
          %p190 = pneg %p57
        $region18: #{tpu_custom_call.1} parent=15 // pred_check_branch
          %192 = sbr.rel (%p190) target = $region20
        $region19: #{tpu_custom_call.1} parent=15 // pred_region
          %s193 = sand.u32 %s47, 1
          %s194 = scalar_lea.sflag [#allocation3], %s193
          %s195 = sand.u32 %s47, 1
          %s196 = smul.addr %s195, 256
          %s197 = scalar_lea.vmem [#allocation2], %s196
          %s198 = smul.u32 2, %s30
          %s199 = smul.u32 16, %s31
          %201 = vsyncadd %s194, 0
          %s202 = smul.addr %s198, 16
          %s203 = sadd.s32 %s199, %s202
          %s204 = smul.addr %s203, 8
          %s205 = scalar_lea.hbm %s0, %s204
          %s206 = sshll.u32 %s205, 4
          %s207 = int_to_ptr.hbm [resolvable:$true] %s206
          %s208 = sshll.u32 %s197, 4
          %s209 = int_to_ptr.vmem [resolvable:$true] %s208
          %214 = dma.hbm_to_vmem [thread:$0]  %s207, 4096, %s209, %s194, 128, 128, 8
        $region20: #{tpu_custom_call.1} parent=15 // pred_fallthru
          _
        // Predicated region
        $region21: #{tpu_custom_call.1} parent=15 // pred_check
          %p215 = pneg %p83
        $region22: #{tpu_custom_call.1} parent=15 // pred_check_branch
          %217 = sbr.rel (%p215) target = $region24
        $region23: #{tpu_custom_call.1} parent=15 // pred_region
          %s218 = sand.u32 %s23, 1
          %s219 = scalar_lea.sflag [#allocation6], %s218
          %s220 = sand.u32 %s73, 1
          %s221 = smul.addr %s220, 256
          %s222 = scalar_lea.vmem [#allocation5], %s221
          %s223 = smul.u32 2, %s30
          %225 = vsyncadd %s219, 0
          %s226 = smul.addr %s223, 16
          %s227 = smul.addr %s226, 8
          %s228 = scalar_lea.hbm %s1, %s227
          %s229 = sshll.u32 %s228, 4
          %s230 = int_to_ptr.hbm [resolvable:$true] %s229
          %s231 = sshll.u32 %s222, 4
          %s232 = int_to_ptr.vmem [resolvable:$true] %s231
          %237 = dma.hbm_to_vmem [thread:$0]  %s230, 4096, %s232, %s219, 128, 128, 8
        $region24: #{tpu_custom_call.1} parent=15 // pred_fallthru
          _
        // Predicated region
        $region25: #{tpu_custom_call.1} parent=15 // pred_check
          %p238 = pneg %p109
        $region26: #{tpu_custom_call.1} parent=15 // pred_check_branch
          %240 = sbr.rel (%p238) target = $region28
        $region27: #{tpu_custom_call.1} parent=15 // pred_region
          %s241 = sand.u32 %s23, 1
          %s242 = scalar_lea.sflag [#allocation6], %s241
          %s243 = sand.u32 %s99, 1
          %s244 = smul.addr %s243, 256
          %s245 = scalar_lea.vmem [#allocation7], %s244
          %s246 = smul.u32 2, %s30
          %248 = vsyncadd %s242, 0
          %s249 = smul.addr %s246, 16
          %s250 = smul.addr %s249, 8
          %s251 = scalar_lea.hbm %s2, %s250
          %s252 = sshll.u32 %s251, 4
          %s253 = int_to_ptr.hbm [resolvable:$true] %s252
          %s254 = sshll.u32 %s245, 4
          %s255 = int_to_ptr.vmem [resolvable:$true] %s254
          %260 = dma.hbm_to_vmem [thread:$0]  %s253, 4096, %s255, %s242, 128, 128, 8
        $region28: #{tpu_custom_call.1} parent=15 // pred_fallthru
          _
      $region16: #{tpu_custom_call.1} parent=5 // pred_fallthru
        _
      %p261 = scmp.le.s32.totalorder 1, %s23
      %p262 = scmp.lt.s32.totalorder %s23, 5
      %p263 = pnand %p261, %p262
      %p264 = pneg %p263
      // Predicated region
      $region29: #{tpu_custom_call.1} parent=5 // pred_check
        _
      $region30: #{tpu_custom_call.1} parent=5 // pred_check_branch
        %266 = sbr.rel (%p263) target = $region32
      $region31: #{tpu_custom_call.1} parent=5 // pred_region
        %s267 = ssub.s32 %s23, 1
        %s268 = sand.u32 %s50, 1
        %s269 = scalar_lea.sflag [#allocation3], %s268
        %s270 = sand.u32 %s50, 1
        %s271 = smul.addr %s270, 256
        %s272 = scalar_lea.vmem [#allocation2], %s271
        // Predicated region
        $region33: #{tpu_custom_call.1} parent=31 // pred_check
          %p273 = pneg %p63
        $region34: #{tpu_custom_call.1} parent=31 // pred_check_branch
          %275 = sbr.rel (%p273) target = $region36
        $region35: #{tpu_custom_call.1} parent=31 // pred_region
          %277 = dma.done %s269, 4096
        $region36: #{tpu_custom_call.1} parent=31 // pred_fallthru
          _
        %s278 = sand.u32 %s28, 1
        %s279 = scalar_lea.sflag [#allocation6], %s278
        %s280 = sand.u32 %s76, 1
        %s281 = smul.addr %s280, 256
        %s282 = scalar_lea.vmem [#allocation5], %s281
        // Predicated region
        $region37: #{tpu_custom_call.1} parent=31 // pred_check
          %p283 = pneg %p89
        $region38: #{tpu_custom_call.1} parent=31 // pred_check_branch
          %285 = sbr.rel (%p283) target = $region40
        $region39: #{tpu_custom_call.1} parent=31 // pred_region
          %287 = dma.done %s279, 4096
        $region40: #{tpu_custom_call.1} parent=31 // pred_fallthru
          _
        %s288 = sand.u32 %s28, 1
        %s289 = scalar_lea.sflag [#allocation6], %s288
        %s290 = sand.u32 %s102, 1
        %s291 = smul.addr %s290, 256
        %s292 = scalar_lea.vmem [#allocation7], %s291
        // Predicated region
        $region41: #{tpu_custom_call.1} parent=31 // pred_check
          %p293 = pneg %p115
        $region42: #{tpu_custom_call.1} parent=31 // pred_check_branch
          %295 = sbr.rel (%p293) target = $region44
        $region43: #{tpu_custom_call.1} parent=31 // pred_region
          %297 = dma.done %s289, 4096
        $region44: #{tpu_custom_call.1} parent=31 // pred_fallthru
          _
        %s298 = sand.u32 %s50, 1
        %s299 = scalar_lea.sflag [#allocation3], %s298
        %s300 = sand.u32 %s50, 1
        %s301 = smul.addr %s300, 256
        %s302 = scalar_lea.vmem [#allocation2], %s301
        %p303 = pneg %p63
        %p304 = pneg %p60
        %s305 = sand.u32 %s28, 1
        %s306 = scalar_lea.sflag [#allocation6], %s305
        %s307 = sand.u32 %s76, 1
        %s308 = smul.addr %s307, 256
        %s309 = scalar_lea.vmem [#allocation5], %s308
        %p310 = pneg %p89
        %p311 = pneg %p86
        %s312 = sand.u32 %s28, 1
        %s313 = scalar_lea.sflag [#allocation6], %s312
        %s314 = sand.u32 %s102, 1
        %s315 = smul.addr %s314, 256
        %s316 = scalar_lea.vmem [#allocation7], %s315
        %p317 = pneg %p115
        %p318 = pneg %p112
        %p319 = pneg %p143
        %p320 = pneg %p140
        %s321 = sand.u32 %s130, 1
        %s322 = scalar_lea.sflag [#allocation4], %s321
        %s323 = sand.u32 %s130, 1
        %s324 = smul.addr %s323, 256
        %s325 = scalar_lea.vmem [#allocation8], %s324
        %p326 = pneg %p171
        %p327 = pneg %p168
        %s328 = sand.u32 %s158, 1
        %s329 = scalar_lea.sflag [#allocation10], %s328
        %s330 = sand.u32 %s158, 1
        %s331 = smul.addr %s330, 256
        %s332 = scalar_lea.vmem [#allocation9], %s331
        %s333 = smul.u32 2, %s32
        %s334 = smul.u32 16, %s33
        %s335 = smul.u32 2, %s32
        %s336 = smul.u32 2, %s32
        %s337 = smul.u32 2, %s32
        %s338 = smul.u32 16, %s33
        %s339 = smul.u32 2, %s32
        %s340 = smul.u32 16, %s33
        %v341 = vld [vmem:[%s272] sm:$0xff]
        %v342 = vld [vmem:[%s272 + $0x8] sm:$0xff]
        %v343 = vld [vmem:[%s272 + $0x10] sm:$0xff]
        %v344 = vld [vmem:[%s272 + $0x18] sm:$0xff]
        %v345 = vld [vmem:[%s272 + $0x20] sm:$0xff]
        %v346 = vld [vmem:[%s272 + $0x28] sm:$0xff]
        %v347 = vld [vmem:[%s272 + $0x30] sm:$0xff]
        %v348 = vld [vmem:[%s272 + $0x38] sm:$0xff]
        %v349 = vld [vmem:[%s272 + $0x40] sm:$0xff]
        %v350 = vld [vmem:[%s272 + $0x48] sm:$0xff]
        %v351 = vld [vmem:[%s272 + $0x50] sm:$0xff]
        %v352 = vld [vmem:[%s272 + $0x58] sm:$0xff]
        %v353 = vld [vmem:[%s272 + $0x60] sm:$0xff]
        %v354 = vld [vmem:[%s272 + $0x68] sm:$0xff]
        %v355 = vld [vmem:[%s272 + $0x70] sm:$0xff]
        %v356 = vld [vmem:[%s272 + $0x78] sm:$0xff]
        %v357 = vld [vmem:[%s272 + $0x80] sm:$0xff]
        %v358 = vld [vmem:[%s272 + $0x88] sm:$0xff]
        %v359 = vld [vmem:[%s272 + $0x90] sm:$0xff]
        %v360 = vld [vmem:[%s272 + $0x98] sm:$0xff]
        %v361 = vld [vmem:[%s272 + $0xa0] sm:$0xff]
        %v362 = vld [vmem:[%s272 + $0xa8] sm:$0xff]
        %v363 = vld [vmem:[%s272 + $0xb0] sm:$0xff]
        %v364 = vld [vmem:[%s272 + $0xb8] sm:$0xff]
        %v365 = vld [vmem:[%s272 + $0xc0] sm:$0xff]
        %v366 = vld [vmem:[%s272 + $0xc8] sm:$0xff]
        %v367 = vld [vmem:[%s272 + $0xd0] sm:$0xff]
        %v368 = vld [vmem:[%s272 + $0xd8] sm:$0xff]
        %v369 = vld [vmem:[%s272 + $0xe0] sm:$0xff]
        %v370 = vld [vmem:[%s272 + $0xe8] sm:$0xff]
        %v371 = vld [vmem:[%s272 + $0xf0] sm:$0xff]
        %v372 = vld [vmem:[%s272 + $0xf8] sm:$0xff]
        %v373 = vmul.f32 %v341, 0.088388346
        %v374 = vmul.f32 %v342, 0.088388346
        %v375 = vmul.f32 %v343, 0.088388346
        %v376 = vmul.f32 %v344, 0.088388346
        %v377 = vmul.f32 %v345, 0.088388346
        %v378 = vmul.f32 %v346, 0.088388346
        %v379 = vmul.f32 %v347, 0.088388346
        %v380 = vmul.f32 %v348, 0.088388346
        %v381 = vmul.f32 %v349, 0.088388346
        %v382 = vmul.f32 %v350, 0.088388346
        %v383 = vmul.f32 %v351, 0.088388346
        %v384 = vmul.f32 %v352, 0.088388346
        %v385 = vmul.f32 %v353, 0.088388346
        %v386 = vmul.f32 %v354, 0.088388346
        %v387 = vmul.f32 %v355, 0.088388346
        %v388 = vmul.f32 %v356, 0.088388346
        %v389 = vmul.f32 %v357, 0.088388346
        %v390 = vmul.f32 %v358, 0.088388346
        %v391 = vmul.f32 %v359, 0.088388346
        %v392 = vmul.f32 %v360, 0.088388346
        %v393 = vmul.f32 %v361, 0.088388346
        %v394 = vmul.f32 %v362, 0.088388346
        %v395 = vmul.f32 %v363, 0.088388346
        %v396 = vmul.f32 %v364, 0.088388346
        %v397 = vmul.f32 %v365, 0.088388346
        %v398 = vmul.f32 %v366, 0.088388346
        %v399 = vmul.f32 %v367, 0.088388346
        %v400 = vmul.f32 %v368, 0.088388346
        %v401 = vmul.f32 %v369, 0.088388346
        %v402 = vmul.f32 %v370, 0.088388346
        %v403 = vmul.f32 %v371, 0.088388346
        %v404 = vmul.f32 %v372, 0.088388346
        %v405 = vld [vmem:[%s282] sm:$0xff]
        %v406 = vld [vmem:[%s282 + $0x8] sm:$0xff]
        %v407 = vld [vmem:[%s282 + $0x10] sm:$0xff]
        %v408 = vld [vmem:[%s282 + $0x18] sm:$0xff]
        %v409 = vld [vmem:[%s282 + $0x20] sm:$0xff]
        %v410 = vld [vmem:[%s282 + $0x28] sm:$0xff]
        %v411 = vld [vmem:[%s282 + $0x30] sm:$0xff]
        %v412 = vld [vmem:[%s282 + $0x38] sm:$0xff]
        %v413 = vld [vmem:[%s282 + $0x40] sm:$0xff]
        %v414 = vld [vmem:[%s282 + $0x48] sm:$0xff]
        %v415 = vld [vmem:[%s282 + $0x50] sm:$0xff]
        %v416 = vld [vmem:[%s282 + $0x58] sm:$0xff]
        %v417 = vld [vmem:[%s282 + $0x60] sm:$0xff]
        %v418 = vld [vmem:[%s282 + $0x68] sm:$0xff]
        %v419 = vld [vmem:[%s282 + $0x70] sm:$0xff]
        %v420 = vld [vmem:[%s282 + $0x78] sm:$0xff]
        %v421 = vld [vmem:[%s282 + $0x80] sm:$0xff]
        %v422 = vld [vmem:[%s282 + $0x88] sm:$0xff]
        %v423 = vld [vmem:[%s282 + $0x90] sm:$0xff]
        %v424 = vld [vmem:[%s282 + $0x98] sm:$0xff]
        %v425 = vld [vmem:[%s282 + $0xa0] sm:$0xff]
        %v426 = vld [vmem:[%s282 + $0xa8] sm:$0xff]
        %v427 = vld [vmem:[%s282 + $0xb0] sm:$0xff]
        %v428 = vld [vmem:[%s282 + $0xb8] sm:$0xff]
        %v429 = vld [vmem:[%s282 + $0xc0] sm:$0xff]
        %v430 = vld [vmem:[%s282 + $0xc8] sm:$0xff]
        %v431 = vld [vmem:[%s282 + $0xd0] sm:$0xff]
        %v432 = vld [vmem:[%s282 + $0xd8] sm:$0xff]
        %v433 = vld [vmem:[%s282 + $0xe0] sm:$0xff]
        %v434 = vld [vmem:[%s282 + $0xe8] sm:$0xff]
        %v435 = vld [vmem:[%s282 + $0xf0] sm:$0xff]
        %v436 = vld [vmem:[%s282 + $0xf8] sm:$0xff]
        %v437 = vpack.c.bf16 %v373, %v373
        %v438 = vpack.c.bf16 %v374, %v374
        %v439 = vpack.c.bf16 %v375, %v375
        %v440 = vpack.c.bf16 %v376, %v376
        %v441 = vpack.c.bf16 %v377, %v377
        %v442 = vpack.c.bf16 %v378, %v378
        %v443 = vpack.c.bf16 %v379, %v379
        %v444 = vpack.c.bf16 %v380, %v380
        %v445 = vpack.c.bf16 %v381, %v381
        %v446 = vpack.c.bf16 %v382, %v382
        %v447 = vpack.c.bf16 %v383, %v383
        %v448 = vpack.c.bf16 %v384, %v384
        %v449 = vpack.c.bf16 %v385, %v385
        %v450 = vpack.c.bf16 %v386, %v386
        %v451 = vpack.c.bf16 %v387, %v387
        %v452 = vpack.c.bf16 %v388, %v388
        %v453 = vpack.c.bf16 %v389, %v389
        %v454 = vpack.c.bf16 %v390, %v390
        %v455 = vpack.c.bf16 %v391, %v391
        %v456 = vpack.c.bf16 %v392, %v392
        %v457 = vpack.c.bf16 %v393, %v393
        %v458 = vpack.c.bf16 %v394, %v394
        %v459 = vpack.c.bf16 %v395, %v395
        %v460 = vpack.c.bf16 %v396, %v396
        %v461 = vpack.c.bf16 %v397, %v397
        %v462 = vpack.c.bf16 %v398, %v398
        %v463 = vpack.c.bf16 %v399, %v399
        %v464 = vpack.c.bf16 %v400, %v400
        %v465 = vpack.c.bf16 %v401, %v401
        %v466 = vpack.c.bf16 %v402, %v402
        %v467 = vpack.c.bf16 %v403, %v403
        %v468 = vpack.c.bf16 %v404, %v404
        %v469 = vpack.c.bf16 %v405, %v405
        %v470 = vpack.c.bf16 %v406, %v406
        %v471 = vpack.c.bf16 %v407, %v407
        %v472 = vpack.c.bf16 %v408, %v408
        %v473 = vpack.c.bf16 %v409, %v409
        %v474 = vpack.c.bf16 %v410, %v410
        %v475 = vpack.c.bf16 %v411, %v411
        %v476 = vpack.c.bf16 %v412, %v412
        %v477 = vpack.c.bf16 %v413, %v413
        %v478 = vpack.c.bf16 %v414, %v414
        %v479 = vpack.c.bf16 %v415, %v415
        %v480 = vpack.c.bf16 %v416, %v416
        %v481 = vpack.c.bf16 %v417, %v417
        %v482 = vpack.c.bf16 %v418, %v418
        %v483 = vpack.c.bf16 %v419, %v419
        %v484 = vpack.c.bf16 %v420, %v420
        %v485 = vpack.c.bf16 %v421, %v421
        %v486 = vpack.c.bf16 %v422, %v422
        %v487 = vpack.c.bf16 %v423, %v423
        %v488 = vpack.c.bf16 %v424, %v424
        %v489 = vpack.c.bf16 %v425, %v425
        %v490 = vpack.c.bf16 %v426, %v426
        %v491 = vpack.c.bf16 %v427, %v427
        %v492 = vpack.c.bf16 %v428, %v428
        %v493 = vpack.c.bf16 %v429, %v429
        %v494 = vpack.c.bf16 %v430, %v430
        %v495 = vpack.c.bf16 %v431, %v431
        %v496 = vpack.c.bf16 %v432, %v432
        %v497 = vpack.c.bf16 %v433, %v433
        %v498 = vpack.c.bf16 %v434, %v434
        %v499 = vpack.c.bf16 %v435, %v435
        %v500 = vpack.c.bf16 %v436, %v436
        %v517 = vunpack.c.l.b16 %v437
        %v518 = vunpack.c.l.b16 %v438
        %v519 = vunpack.c.l.b16 %v439
        %v520 = vunpack.c.l.b16 %v440
        %v521 = vunpack.c.l.b16 %v441
        %v522 = vunpack.c.l.b16 %v442
        %v523 = vunpack.c.l.b16 %v443
        %v524 = vunpack.c.l.b16 %v444
        %v525 = vunpack.c.l.b16 %v445
        %v526 = vunpack.c.l.b16 %v446
        %v527 = vunpack.c.l.b16 %v447
        %v528 = vunpack.c.l.b16 %v448
        %v529 = vunpack.c.l.b16 %v449
        %v530 = vunpack.c.l.b16 %v450
        %v531 = vunpack.c.l.b16 %v451
        %v532 = vunpack.c.l.b16 %v452
        %v533 = vpack.c.b16 %v518, %v517
        %v534 = vpack.c.b16 %v520, %v519
        %v535 = vpack.c.b16 %v522, %v521
        %v536 = vpack.c.b16 %v524, %v523
        %v537 = vpack.c.b16 %v526, %v525
        %v538 = vpack.c.b16 %v528, %v527
        %v539 = vpack.c.b16 %v530, %v529
        %v540 = vpack.c.b16 %v532, %v531
        %v565 = vunpack.c.l.b16 %v469
        %v566 = vunpack.c.l.b16 %v470
        %v567 = vunpack.c.l.b16 %v471
        %v568 = vunpack.c.l.b16 %v472
        %v569 = vunpack.c.l.b16 %v473
        %v570 = vunpack.c.l.b16 %v474
        %v571 = vunpack.c.l.b16 %v475
        %v572 = vunpack.c.l.b16 %v476
        %v573 = vunpack.c.l.b16 %v477
        %v574 = vunpack.c.l.b16 %v478
        %v575 = vunpack.c.l.b16 %v479
        %v576 = vunpack.c.l.b16 %v480
        %v577 = vunpack.c.l.b16 %v481
        %v578 = vunpack.c.l.b16 %v482
        %v579 = vunpack.c.l.b16 %v483
        %v580 = vunpack.c.l.b16 %v484
        %v581 = vpack.c.b16 %v566, %v565
        %v582 = vpack.c.b16 %v568, %v567
        %v583 = vpack.c.b16 %v570, %v569
        %v584 = vpack.c.b16 %v572, %v571
        %v585 = vpack.c.b16 %v574, %v573
        %v586 = vpack.c.b16 %v576, %v575
        %v587 = vpack.c.b16 %v578, %v577
        %v588 = vpack.c.b16 %v580, %v579
        %597 = vmatpush.bf16.xpose.msra.mxu0 %v588
        %598 = vmatpush.bf16.xpose.msra.mxu0 %v587
        %599 = vmatpush.bf16.xpose.msra.mxu0 %v586
        %600 = vmatpush.bf16.xpose.msra.mxu0 %v585
        %601 = vmatpush.bf16.xpose.msra.mxu0 %v584
        %602 = vmatpush.bf16.xpose.msra.mxu0 %v583
        %603 = vmatpush.bf16.xpose.msra.mxu0 %v582
        %604 = vmatpush.bf16.xpose.msra.mxu0 %v581
        %605 = vmatmul.bf16.gmra.mxu0 %v533
        %v606 = vpop.f32.mrf.mxu0
        %v607 = vadd.f32 0.0, %v606
        %v608 = vpop.f32.mrf.mxu0
        %v609 = vadd.f32 0.0, %v608
        %610 = vmatmul.bf16.gmra.mxu0 %v534
        %v611 = vpop.f32.mrf.mxu0
        %v612 = vadd.f32 0.0, %v611
        %v613 = vpop.f32.mrf.mxu0
        %v614 = vadd.f32 0.0, %v613
        %615 = vmatmul.bf16.gmra.mxu0 %v535
        %v616 = vpop.f32.mrf.mxu0
        %v617 = vadd.f32 0.0, %v616
        %v618 = vpop.f32.mrf.mxu0
        %v619 = vadd.f32 0.0, %v618
        %620 = vmatmul.bf16.gmra.mxu0 %v536
        %v621 = vpop.f32.mrf.mxu0
        %v622 = vadd.f32 0.0, %v621
        %v623 = vpop.f32.mrf.mxu0
        %v624 = vadd.f32 0.0, %v623
        %625 = vmatmul.bf16.gmra.mxu0 %v537
        %v626 = vpop.f32.mrf.mxu0
        %v627 = vadd.f32 0.0, %v626
        %v628 = vpop.f32.mrf.mxu0
        %v629 = vadd.f32 0.0, %v628
        %630 = vmatmul.bf16.gmra.mxu0 %v538
        %v631 = vpop.f32.mrf.mxu0
        %v632 = vadd.f32 0.0, %v631
        %v633 = vpop.f32.mrf.mxu0
        %v634 = vadd.f32 0.0, %v633
        %635 = vmatmul.bf16.gmra.mxu0 %v539
        %v636 = vpop.f32.mrf.mxu0
        %v637 = vadd.f32 0.0, %v636
        %v638 = vpop.f32.mrf.mxu0
        %v639 = vadd.f32 0.0, %v638
        %640 = vmatmul.bf16.gmra.mxu0 %v540
        %v641 = vpop.f32.mrf.mxu0
        %v642 = vadd.f32 0.0, %v641
        %v643 = vpop.f32.mrf.mxu0
        %v644 = vadd.f32 0.0, %v643
        %645 = vdwg.mxu0
        %v662 = vunpack.c.l.b16 %v453
        %v663 = vunpack.c.l.b16 %v454
        %v664 = vunpack.c.l.b16 %v455
        %v665 = vunpack.c.l.b16 %v456
        %v666 = vunpack.c.l.b16 %v457
        %v667 = vunpack.c.l.b16 %v458
        %v668 = vunpack.c.l.b16 %v459
        %v669 = vunpack.c.l.b16 %v460
        %v670 = vunpack.c.l.b16 %v461
        %v671 = vunpack.c.l.b16 %v462
        %v672 = vunpack.c.l.b16 %v463
        %v673 = vunpack.c.l.b16 %v464
        %v674 = vunpack.c.l.b16 %v465
        %v675 = vunpack.c.l.b16 %v466
        %v676 = vunpack.c.l.b16 %v467
        %v677 = vunpack.c.l.b16 %v468
        %v678 = vpack.c.b16 %v663, %v662
        %v679 = vpack.c.b16 %v665, %v664
        %v680 = vpack.c.b16 %v667, %v666
        %v681 = vpack.c.b16 %v669, %v668
        %v682 = vpack.c.b16 %v671, %v670
        %v683 = vpack.c.b16 %v673, %v672
        %v684 = vpack.c.b16 %v675, %v674
        %v685 = vpack.c.b16 %v677, %v676
        %v710 = vunpack.c.l.b16 %v485
        %v711 = vunpack.c.l.b16 %v486
        %v712 = vunpack.c.l.b16 %v487
        %v713 = vunpack.c.l.b16 %v488
        %v714 = vunpack.c.l.b16 %v489
        %v715 = vunpack.c.l.b16 %v490
        %v716 = vunpack.c.l.b16 %v491
        %v717 = vunpack.c.l.b16 %v492
        %v718 = vunpack.c.l.b16 %v493
        %v719 = vunpack.c.l.b16 %v494
        %v720 = vunpack.c.l.b16 %v495
        %v721 = vunpack.c.l.b16 %v496
        %v722 = vunpack.c.l.b16 %v497
        %v723 = vunpack.c.l.b16 %v498
        %v724 = vunpack.c.l.b16 %v499
        %v725 = vunpack.c.l.b16 %v500
        %v726 = vpack.c.b16 %v711, %v710
        %v727 = vpack.c.b16 %v713, %v712
        %v728 = vpack.c.b16 %v715, %v714
        %v729 = vpack.c.b16 %v717, %v716
        %v730 = vpack.c.b16 %v719, %v718
        %v731 = vpack.c.b16 %v721, %v720
        %v732 = vpack.c.b16 %v723, %v722
        %v733 = vpack.c.b16 %v725, %v724
        %742 = vmatpush.bf16.xpose.msra.mxu0 %v733
        %743 = vmatpush.bf16.xpose.msra.mxu0 %v732
        %744 = vmatpush.bf16.xpose.msra.mxu0 %v731
        %745 = vmatpush.bf16.xpose.msra.mxu0 %v730
        %746 = vmatpush.bf16.xpose.msra.mxu0 %v729
        %747 = vmatpush.bf16.xpose.msra.mxu0 %v728
        %748 = vmatpush.bf16.xpose.msra.mxu0 %v727
        %749 = vmatpush.bf16.xpose.msra.mxu0 %v726
        %750 = vmatmul.bf16.gmra.mxu0 %v678
        %v751 = vpop.f32.mrf.mxu0
        %v752 = vadd.f32 0.0, %v751
        %v753 = vpop.f32.mrf.mxu0
        %v754 = vadd.f32 0.0, %v753
        %755 = vmatmul.bf16.gmra.mxu0 %v679
        %v756 = vpop.f32.mrf.mxu0
        %v757 = vadd.f32 0.0, %v756
        %v758 = vpop.f32.mrf.mxu0
        %v759 = vadd.f32 0.0, %v758
        %760 = vmatmul.bf16.gmra.mxu0 %v680
        %v761 = vpop.f32.mrf.mxu0
        %v762 = vadd.f32 0.0, %v761
        %v763 = vpop.f32.mrf.mxu0
        %v764 = vadd.f32 0.0, %v763
        %765 = vmatmul.bf16.gmra.mxu0 %v681
        %v766 = vpop.f32.mrf.mxu0
        %v767 = vadd.f32 0.0, %v766
        %v768 = vpop.f32.mrf.mxu0
        %v769 = vadd.f32 0.0, %v768
        %770 = vmatmul.bf16.gmra.mxu0 %v682
        %v771 = vpop.f32.mrf.mxu0
        %v772 = vadd.f32 0.0, %v771
        %v773 = vpop.f32.mrf.mxu0
        %v774 = vadd.f32 0.0, %v773
        %775 = vmatmul.bf16.gmra.mxu0 %v683
        %v776 = vpop.f32.mrf.mxu0
        %v777 = vadd.f32 0.0, %v776
        %v778 = vpop.f32.mrf.mxu0
        %v779 = vadd.f32 0.0, %v778
        %780 = vmatmul.bf16.gmra.mxu0 %v684
        %v781 = vpop.f32.mrf.mxu0
        %v782 = vadd.f32 0.0, %v781
        %v783 = vpop.f32.mrf.mxu0
        %v784 = vadd.f32 0.0, %v783
        %785 = vmatmul.bf16.gmra.mxu0 %v685
        %v786 = vpop.f32.mrf.mxu0
        %v787 = vadd.f32 0.0, %v786
        %v788 = vpop.f32.mrf.mxu0
        %v789 = vadd.f32 0.0, %v788
        %790 = vdwg.mxu0
        %791 = vmax.xlane.f32.xlu0 %v607
        %v792 = vpop.xlane.xlu0 %791
        %793 = vmax.xlane.f32.xlu0 %v609
        %v794 = vpop.xlane.xlu0 %793
        %795 = vmax.xlane.f32.xlu0 %v612
        %v796 = vpop.xlane.xlu0 %795
        %797 = vmax.xlane.f32.xlu0 %v614
        %v798 = vpop.xlane.xlu0 %797
        %799 = vmax.xlane.f32.xlu0 %v617
        %v800 = vpop.xlane.xlu0 %799
        %801 = vmax.xlane.f32.xlu0 %v619
        %v802 = vpop.xlane.xlu0 %801
        %803 = vmax.xlane.f32.xlu0 %v622
        %v804 = vpop.xlane.xlu0 %803
        %805 = vmax.xlane.f32.xlu0 %v624
        %v806 = vpop.xlane.xlu0 %805
        %807 = vmax.xlane.f32.xlu0 %v627
        %v808 = vpop.xlane.xlu0 %807
        %809 = vmax.xlane.f32.xlu0 %v629
        %v810 = vpop.xlane.xlu0 %809
        %811 = vmax.xlane.f32.xlu0 %v632
        %v812 = vpop.xlane.xlu0 %811
        %813 = vmax.xlane.f32.xlu0 %v634
        %v814 = vpop.xlane.xlu0 %813
        %815 = vmax.xlane.f32.xlu0 %v637
        %v816 = vpop.xlane.xlu0 %815
        %817 = vmax.xlane.f32.xlu0 %v639
        %v818 = vpop.xlane.xlu0 %817
        %819 = vmax.xlane.f32.xlu0 %v642
        %v820 = vpop.xlane.xlu0 %819
        %821 = vmax.xlane.f32.xlu0 %v644
        %v822 = vpop.xlane.xlu0 %821
        %823 = vmax.xlane.f32.xlu0 %v752
        %v824 = vpop.xlane.xlu0 %823
        %825 = vmax.xlane.f32.xlu0 %v754
        %v826 = vpop.xlane.xlu0 %825
        %827 = vmax.xlane.f32.xlu0 %v757
        %v828 = vpop.xlane.xlu0 %827
        %829 = vmax.xlane.f32.xlu0 %v759
        %v830 = vpop.xlane.xlu0 %829
        %831 = vmax.xlane.f32.xlu0 %v762
        %v832 = vpop.xlane.xlu0 %831
        %833 = vmax.xlane.f32.xlu0 %v764
        %v834 = vpop.xlane.xlu0 %833
        %835 = vmax.xlane.f32.xlu0 %v767
        %v836 = vpop.xlane.xlu0 %835
        %837 = vmax.xlane.f32.xlu0 %v769
        %v838 = vpop.xlane.xlu0 %837
        %839 = vmax.xlane.f32.xlu0 %v772
        %v840 = vpop.xlane.xlu0 %839
        %841 = vmax.xlane.f32.xlu0 %v774
        %v842 = vpop.xlane.xlu0 %841
        %843 = vmax.xlane.f32.xlu0 %v777
        %v844 = vpop.xlane.xlu0 %843
        %845 = vmax.xlane.f32.xlu0 %v779
        %v846 = vpop.xlane.xlu0 %845
        %847 = vmax.xlane.f32.xlu0 %v782
        %v848 = vpop.xlane.xlu0 %847
        %849 = vmax.xlane.f32.xlu0 %v784
        %v850 = vpop.xlane.xlu0 %849
        %851 = vmax.xlane.f32.xlu0 %v787
        %v852 = vpop.xlane.xlu0 %851
        %853 = vmax.xlane.f32.xlu0 %v789
        %v854 = vpop.xlane.xlu0 %853
        %v855 = vsub.f32 %v607, %v792
        %v856 = vsub.f32 %v609, %v794
        %v857 = vsub.f32 %v612, %v796
        %v858 = vsub.f32 %v614, %v798
        %v859 = vsub.f32 %v617, %v800
        %v860 = vsub.f32 %v619, %v802
        %v861 = vsub.f32 %v622, %v804
        %v862 = vsub.f32 %v624, %v806
        %v863 = vsub.f32 %v627, %v808
        %v864 = vsub.f32 %v629, %v810
        %v865 = vsub.f32 %v632, %v812
        %v866 = vsub.f32 %v634, %v814
        %v867 = vsub.f32 %v637, %v816
        %v868 = vsub.f32 %v639, %v818
        %v869 = vsub.f32 %v642, %v820
        %v870 = vsub.f32 %v644, %v822
        %v871 = vsub.f32 %v752, %v824
        %v872 = vsub.f32 %v754, %v826
        %v873 = vsub.f32 %v757, %v828
        %v874 = vsub.f32 %v759, %v830
        %v875 = vsub.f32 %v762, %v832
        %v876 = vsub.f32 %v764, %v834
        %v877 = vsub.f32 %v767, %v836
        %v878 = vsub.f32 %v769, %v838
        %v879 = vsub.f32 %v772, %v840
        %v880 = vsub.f32 %v774, %v842
        %v881 = vsub.f32 %v777, %v844
        %v882 = vsub.f32 %v779, %v846
        %v883 = vsub.f32 %v782, %v848
        %v884 = vsub.f32 %v784, %v850
        %v885 = vsub.f32 %v787, %v852
        %v886 = vsub.f32 %v789, %v854
        %v887 = vmul.f32 %v855, 1.442695
        %v888 = vpow.pop %v887
        %v889 = vmul.f32 %v856, 1.442695
        %v890 = vpow.pop %v889
        %v891 = vmul.f32 %v857, 1.442695
        %v892 = vpow.pop %v891
        %v893 = vmul.f32 %v858, 1.442695
        %v894 = vpow.pop %v893
        %v895 = vmul.f32 %v859, 1.442695
        %v896 = vpow.pop %v895
        %v897 = vmul.f32 %v860, 1.442695
        %v898 = vpow.pop %v897
        %v899 = vmul.f32 %v861, 1.442695
        %v900 = vpow.pop %v899
        %v901 = vmul.f32 %v862, 1.442695
        %v902 = vpow.pop %v901
        %v903 = vmul.f32 %v863, 1.442695
        %v904 = vpow.pop %v903
        %v905 = vmul.f32 %v864, 1.442695
        %v906 = vpow.pop %v905
        %v907 = vmul.f32 %v865, 1.442695
        %v908 = vpow.pop %v907
        %v909 = vmul.f32 %v866, 1.442695
        %v910 = vpow.pop %v909
        %v911 = vmul.f32 %v867, 1.442695
        %v912 = vpow.pop %v911
        %v913 = vmul.f32 %v868, 1.442695
        %v914 = vpow.pop %v913
        %v915 = vmul.f32 %v869, 1.442695
        %v916 = vpow.pop %v915
        %v917 = vmul.f32 %v870, 1.442695
        %v918 = vpow.pop %v917
        %v919 = vmul.f32 %v871, 1.442695
        %v920 = vpow.pop %v919
        %v921 = vmul.f32 %v872, 1.442695
        %v922 = vpow.pop %v921
        %v923 = vmul.f32 %v873, 1.442695
        %v924 = vpow.pop %v923
        %v925 = vmul.f32 %v874, 1.442695
        %v926 = vpow.pop %v925
        %v927 = vmul.f32 %v875, 1.442695
        %v928 = vpow.pop %v927
        %v929 = vmul.f32 %v876, 1.442695
        %v930 = vpow.pop %v929
        %v931 = vmul.f32 %v877, 1.442695
        %v932 = vpow.pop %v931
        %v933 = vmul.f32 %v878, 1.442695
        %v934 = vpow.pop %v933
        %v935 = vmul.f32 %v879, 1.442695
        %v936 = vpow.pop %v935
        %v937 = vmul.f32 %v880, 1.442695
        %v938 = vpow.pop %v937
        %v939 = vmul.f32 %v881, 1.442695
        %v940 = vpow.pop %v939
        %v941 = vmul.f32 %v882, 1.442695
        %v942 = vpow.pop %v941
        %v943 = vmul.f32 %v883, 1.442695
        %v944 = vpow.pop %v943
        %v945 = vmul.f32 %v884, 1.442695
        %v946 = vpow.pop %v945
        %v947 = vmul.f32 %v885, 1.442695
        %v948 = vpow.pop %v947
        %v949 = vmul.f32 %v886, 1.442695
        %v950 = vpow.pop %v949
        %951 = vadd.xlane.f32.xlu0 %v888
        %v952 = vpop.xlane.xlu0 %951
        %953 = vadd.xlane.f32.xlu0 %v890
        %v954 = vpop.xlane.xlu0 %953
        %955 = vadd.xlane.f32.xlu0 %v892
        %v956 = vpop.xlane.xlu0 %955
        %957 = vadd.xlane.f32.xlu0 %v894
        %v958 = vpop.xlane.xlu0 %957
        %959 = vadd.xlane.f32.xlu0 %v896
        %v960 = vpop.xlane.xlu0 %959
        %961 = vadd.xlane.f32.xlu0 %v898
        %v962 = vpop.xlane.xlu0 %961
        %963 = vadd.xlane.f32.xlu0 %v900
        %v964 = vpop.xlane.xlu0 %963
        %965 = vadd.xlane.f32.xlu0 %v902
        %v966 = vpop.xlane.xlu0 %965
        %967 = vadd.xlane.f32.xlu0 %v904
        %v968 = vpop.xlane.xlu0 %967
        %969 = vadd.xlane.f32.xlu0 %v906
        %v970 = vpop.xlane.xlu0 %969
        %971 = vadd.xlane.f32.xlu0 %v908
        %v972 = vpop.xlane.xlu0 %971
        %973 = vadd.xlane.f32.xlu0 %v910
        %v974 = vpop.xlane.xlu0 %973
        %975 = vadd.xlane.f32.xlu0 %v912
        %v976 = vpop.xlane.xlu0 %975
        %977 = vadd.xlane.f32.xlu0 %v914
        %v978 = vpop.xlane.xlu0 %977
        %979 = vadd.xlane.f32.xlu0 %v916
        %v980 = vpop.xlane.xlu0 %979
        %981 = vadd.xlane.f32.xlu0 %v918
        %v982 = vpop.xlane.xlu0 %981
        %983 = vadd.xlane.f32.xlu0 %v920
        %v984 = vpop.xlane.xlu0 %983
        %985 = vadd.xlane.f32.xlu0 %v922
        %v986 = vpop.xlane.xlu0 %985
        %987 = vadd.xlane.f32.xlu0 %v924
        %v988 = vpop.xlane.xlu0 %987
        %989 = vadd.xlane.f32.xlu0 %v926
        %v990 = vpop.xlane.xlu0 %989
        %991 = vadd.xlane.f32.xlu0 %v928
        %v992 = vpop.xlane.xlu0 %991
        %993 = vadd.xlane.f32.xlu0 %v930
        %v994 = vpop.xlane.xlu0 %993
        %995 = vadd.xlane.f32.xlu0 %v932
        %v996 = vpop.xlane.xlu0 %995
        %997 = vadd.xlane.f32.xlu0 %v934
        %v998 = vpop.xlane.xlu0 %997
        %999 = vadd.xlane.f32.xlu0 %v936
        %v1000 = vpop.xlane.xlu0 %999
        %1001 = vadd.xlane.f32.xlu0 %v938
        %v1002 = vpop.xlane.xlu0 %1001
        %1003 = vadd.xlane.f32.xlu0 %v940
        %v1004 = vpop.xlane.xlu0 %1003
        %1005 = vadd.xlane.f32.xlu0 %v942
        %v1006 = vpop.xlane.xlu0 %1005
        %1007 = vadd.xlane.f32.xlu0 %v944
        %v1008 = vpop.xlane.xlu0 %1007
        %1009 = vadd.xlane.f32.xlu0 %v946
        %v1010 = vpop.xlane.xlu0 %1009
        %1011 = vadd.xlane.f32.xlu0 %v948
        %v1012 = vpop.xlane.xlu0 %1011
        %1013 = vadd.xlane.f32.xlu0 %v950
        %v1014 = vpop.xlane.xlu0 %1013
        %v1015 = vrcp.pop %v952
        %v1016 = vrcp.pop %v954
        %v1017 = vrcp.pop %v956
        %v1018 = vrcp.pop %v958
        %v1019 = vrcp.pop %v960
        %v1020 = vrcp.pop %v962
        %v1021 = vrcp.pop %v964
        %v1022 = vrcp.pop %v966
        %v1023 = vrcp.pop %v968
        %v1024 = vrcp.pop %v970
        %v1025 = vrcp.pop %v972
        %v1026 = vrcp.pop %v974
        %v1027 = vrcp.pop %v976
        %v1028 = vrcp.pop %v978
        %v1029 = vrcp.pop %v980
        %v1030 = vrcp.pop %v982
        %v1031 = vrcp.pop %v984
        %v1032 = vrcp.pop %v986
        %v1033 = vrcp.pop %v988
        %v1034 = vrcp.pop %v990
        %v1035 = vrcp.pop %v992
        %v1036 = vrcp.pop %v994
        %v1037 = vrcp.pop %v996
        %v1038 = vrcp.pop %v998
        %v1039 = vrcp.pop %v1000
        %v1040 = vrcp.pop %v1002
        %v1041 = vrcp.pop %v1004
        %v1042 = vrcp.pop %v1006
        %v1043 = vrcp.pop %v1008
        %v1044 = vrcp.pop %v1010
        %v1045 = vrcp.pop %v1012
        %v1046 = vrcp.pop %v1014
        %v1047 = vmul.f32 %v888, %v1015
        %v1048 = vmul.f32 %v890, %v1016
        %v1049 = vmul.f32 %v892, %v1017
        %v1050 = vmul.f32 %v894, %v1018
        %v1051 = vmul.f32 %v896, %v1019
        %v1052 = vmul.f32 %v898, %v1020
        %v1053 = vmul.f32 %v900, %v1021
        %v1054 = vmul.f32 %v902, %v1022
        %v1055 = vmul.f32 %v904, %v1023
        %v1056 = vmul.f32 %v906, %v1024
        %v1057 = vmul.f32 %v908, %v1025
        %v1058 = vmul.f32 %v910, %v1026
        %v1059 = vmul.f32 %v912, %v1027
        %v1060 = vmul.f32 %v914, %v1028
        %v1061 = vmul.f32 %v916, %v1029
        %v1062 = vmul.f32 %v918, %v1030
        %v1063 = vmul.f32 %v920, %v1031
        %v1064 = vmul.f32 %v922, %v1032
        %v1065 = vmul.f32 %v924, %v1033
        %v1066 = vmul.f32 %v926, %v1034
        %v1067 = vmul.f32 %v928, %v1035
        %v1068 = vmul.f32 %v930, %v1036
        %v1069 = vmul.f32 %v932, %v1037
        %v1070 = vmul.f32 %v934, %v1038
        %v1071 = vmul.f32 %v936, %v1039
        %v1072 = vmul.f32 %v938, %v1040
        %v1073 = vmul.f32 %v940, %v1041
        %v1074 = vmul.f32 %v942, %v1042
        %v1075 = vmul.f32 %v944, %v1043
        %v1076 = vmul.f32 %v946, %v1044
        %v1077 = vmul.f32 %v948, %v1045
        %v1078 = vmul.f32 %v950, %v1046
        %1079 = vst [vmem:[%s332] sm:$0xff] %v1047
        %1080 = vst [vmem:[%s332 + $0x8] sm:$0xff] %v1048
        %1081 = vst [vmem:[%s332 + $0x10] sm:$0xff] %v1049
        %1082 = vst [vmem:[%s332 + $0x18] sm:$0xff] %v1050
        %1083 = vst [vmem:[%s332 + $0x20] sm:$0xff] %v1051
        %1084 = vst [vmem:[%s332 + $0x28] sm:$0xff] %v1052
        %1085 = vst [vmem:[%s332 + $0x30] sm:$0xff] %v1053
        %1086 = vst [vmem:[%s332 + $0x38] sm:$0xff] %v1054
        %1087 = vst [vmem:[%s332 + $0x40] sm:$0xff] %v1055
        %1088 = vst [vmem:[%s332 + $0x48] sm:$0xff] %v1056
        %1089 = vst [vmem:[%s332 + $0x50] sm:$0xff] %v1057
        %1090 = vst [vmem:[%s332 + $0x58] sm:$0xff] %v1058
        %1091 = vst [vmem:[%s332 + $0x60] sm:$0xff] %v1059
        %1092 = vst [vmem:[%s332 + $0x68] sm:$0xff] %v1060
        %1093 = vst [vmem:[%s332 + $0x70] sm:$0xff] %v1061
        %1094 = vst [vmem:[%s332 + $0x78] sm:$0xff] %v1062
        %1095 = vst [vmem:[%s332 + $0x80] sm:$0xff] %v1063
        %1096 = vst [vmem:[%s332 + $0x88] sm:$0xff] %v1064
        %1097 = vst [vmem:[%s332 + $0x90] sm:$0xff] %v1065
        %1098 = vst [vmem:[%s332 + $0x98] sm:$0xff] %v1066
        %1099 = vst [vmem:[%s332 + $0xa0] sm:$0xff] %v1067
        %1100 = vst [vmem:[%s332 + $0xa8] sm:$0xff] %v1068
        %1101 = vst [vmem:[%s332 + $0xb0] sm:$0xff] %v1069
        %1102 = vst [vmem:[%s332 + $0xb8] sm:$0xff] %v1070
        %1103 = vst [vmem:[%s332 + $0xc0] sm:$0xff] %v1071
        %1104 = vst [vmem:[%s332 + $0xc8] sm:$0xff] %v1072
        %1105 = vst [vmem:[%s332 + $0xd0] sm:$0xff] %v1073
        %1106 = vst [vmem:[%s332 + $0xd8] sm:$0xff] %v1074
        %1107 = vst [vmem:[%s332 + $0xe0] sm:$0xff] %v1075
        %1108 = vst [vmem:[%s332 + $0xe8] sm:$0xff] %v1076
        %1109 = vst [vmem:[%s332 + $0xf0] sm:$0xff] %v1077
        %1110 = vst [vmem:[%s332 + $0xf8] sm:$0xff] %v1078
        %v1111 = vpack.c.bf16 %v1047, %v1047
        %v1112 = vpack.c.bf16 %v1048, %v1048
        %v1113 = vpack.c.bf16 %v1049, %v1049
        %v1114 = vpack.c.bf16 %v1050, %v1050
        %v1115 = vpack.c.bf16 %v1051, %v1051
        %v1116 = vpack.c.bf16 %v1052, %v1052
        %v1117 = vpack.c.bf16 %v1053, %v1053
        %v1118 = vpack.c.bf16 %v1054, %v1054
        %v1119 = vpack.c.bf16 %v1055, %v1055
        %v1120 = vpack.c.bf16 %v1056, %v1056
        %v1121 = vpack.c.bf16 %v1057, %v1057
        %v1122 = vpack.c.bf16 %v1058, %v1058
        %v1123 = vpack.c.bf16 %v1059, %v1059
        %v1124 = vpack.c.bf16 %v1060, %v1060
        %v1125 = vpack.c.bf16 %v1061, %v1061
        %v1126 = vpack.c.bf16 %v1062, %v1062
        %v1127 = vpack.c.bf16 %v1063, %v1063
        %v1128 = vpack.c.bf16 %v1064, %v1064
        %v1129 = vpack.c.bf16 %v1065, %v1065
        %v1130 = vpack.c.bf16 %v1066, %v1066
        %v1131 = vpack.c.bf16 %v1067, %v1067
        %v1132 = vpack.c.bf16 %v1068, %v1068
        %v1133 = vpack.c.bf16 %v1069, %v1069
        %v1134 = vpack.c.bf16 %v1070, %v1070
        %v1135 = vpack.c.bf16 %v1071, %v1071
        %v1136 = vpack.c.bf16 %v1072, %v1072
        %v1137 = vpack.c.bf16 %v1073, %v1073
        %v1138 = vpack.c.bf16 %v1074, %v1074
        %v1139 = vpack.c.bf16 %v1075, %v1075
        %v1140 = vpack.c.bf16 %v1076, %v1076
        %v1141 = vpack.c.bf16 %v1077, %v1077
        %v1142 = vpack.c.bf16 %v1078, %v1078
        %v1143 = vld [vmem:[%s292] sm:$0xff]
        %v1144 = vld [vmem:[%s292 + $0x8] sm:$0xff]
        %v1145 = vld [vmem:[%s292 + $0x10] sm:$0xff]
        %v1146 = vld [vmem:[%s292 + $0x18] sm:$0xff]
        %v1147 = vld [vmem:[%s292 + $0x20] sm:$0xff]
        %v1148 = vld [vmem:[%s292 + $0x28] sm:$0xff]
        %v1149 = vld [vmem:[%s292 + $0x30] sm:$0xff]
        %v1150 = vld [vmem:[%s292 + $0x38] sm:$0xff]
        %v1151 = vld [vmem:[%s292 + $0x40] sm:$0xff]
        %v1152 = vld [vmem:[%s292 + $0x48] sm:$0xff]
        %v1153 = vld [vmem:[%s292 + $0x50] sm:$0xff]
        %v1154 = vld [vmem:[%s292 + $0x58] sm:$0xff]
        %v1155 = vld [vmem:[%s292 + $0x60] sm:$0xff]
        %v1156 = vld [vmem:[%s292 + $0x68] sm:$0xff]
        %v1157 = vld [vmem:[%s292 + $0x70] sm:$0xff]
        %v1158 = vld [vmem:[%s292 + $0x78] sm:$0xff]
        %v1159 = vld [vmem:[%s292 + $0x80] sm:$0xff]
        %v1160 = vld [vmem:[%s292 + $0x88] sm:$0xff]
        %v1161 = vld [vmem:[%s292 + $0x90] sm:$0xff]
        %v1162 = vld [vmem:[%s292 + $0x98] sm:$0xff]
        %v1163 = vld [vmem:[%s292 + $0xa0] sm:$0xff]
        %v1164 = vld [vmem:[%s292 + $0xa8] sm:$0xff]
        %v1165 = vld [vmem:[%s292 + $0xb0] sm:$0xff]
        %v1166 = vld [vmem:[%s292 + $0xb8] sm:$0xff]
        %v1167 = vld [vmem:[%s292 + $0xc0] sm:$0xff]
        %v1168 = vld [vmem:[%s292 + $0xc8] sm:$0xff]
        %v1169 = vld [vmem:[%s292 + $0xd0] sm:$0xff]
        %v1170 = vld [vmem:[%s292 + $0xd8] sm:$0xff]
        %v1171 = vld [vmem:[%s292 + $0xe0] sm:$0xff]
        %v1172 = vld [vmem:[%s292 + $0xe8] sm:$0xff]
        %v1173 = vld [vmem:[%s292 + $0xf0] sm:$0xff]
        %v1174 = vld [vmem:[%s292 + $0xf8] sm:$0xff]
        %v1175 = vpack.c.bf16 %v1143, %v1143
        %v1176 = vpack.c.bf16 %v1144, %v1144
        %v1177 = vpack.c.bf16 %v1145, %v1145
        %v1178 = vpack.c.bf16 %v1146, %v1146
        %v1179 = vpack.c.bf16 %v1147, %v1147
        %v1180 = vpack.c.bf16 %v1148, %v1148
        %v1181 = vpack.c.bf16 %v1149, %v1149
        %v1182 = vpack.c.bf16 %v1150, %v1150
        %v1183 = vpack.c.bf16 %v1151, %v1151
        %v1184 = vpack.c.bf16 %v1152, %v1152
        %v1185 = vpack.c.bf16 %v1153, %v1153
        %v1186 = vpack.c.bf16 %v1154, %v1154
        %v1187 = vpack.c.bf16 %v1155, %v1155
        %v1188 = vpack.c.bf16 %v1156, %v1156
        %v1189 = vpack.c.bf16 %v1157, %v1157
        %v1190 = vpack.c.bf16 %v1158, %v1158
        %v1191 = vpack.c.bf16 %v1159, %v1159
        %v1192 = vpack.c.bf16 %v1160, %v1160
        %v1193 = vpack.c.bf16 %v1161, %v1161
        %v1194 = vpack.c.bf16 %v1162, %v1162
        %v1195 = vpack.c.bf16 %v1163, %v1163
        %v1196 = vpack.c.bf16 %v1164, %v1164
        %v1197 = vpack.c.bf16 %v1165, %v1165
        %v1198 = vpack.c.bf16 %v1166, %v1166
        %v1199 = vpack.c.bf16 %v1167, %v1167
        %v1200 = vpack.c.bf16 %v1168, %v1168
        %v1201 = vpack.c.bf16 %v1169, %v1169
        %v1202 = vpack.c.bf16 %v1170, %v1170
        %v1203 = vpack.c.bf16 %v1171, %v1171
        %v1204 = vpack.c.bf16 %v1172, %v1172
        %v1205 = vpack.c.bf16 %v1173, %v1173
        %v1206 = vpack.c.bf16 %v1174, %v1174
        %v1223 = vunpack.c.l.b16 %v1111
        %v1224 = vunpack.c.l.b16 %v1112
        %v1225 = vunpack.c.l.b16 %v1113
        %v1226 = vunpack.c.l.b16 %v1114
        %v1227 = vunpack.c.l.b16 %v1115
        %v1228 = vunpack.c.l.b16 %v1116
        %v1229 = vunpack.c.l.b16 %v1117
        %v1230 = vunpack.c.l.b16 %v1118
        %v1231 = vunpack.c.l.b16 %v1119
        %v1232 = vunpack.c.l.b16 %v1120
        %v1233 = vunpack.c.l.b16 %v1121
        %v1234 = vunpack.c.l.b16 %v1122
        %v1235 = vunpack.c.l.b16 %v1123
        %v1236 = vunpack.c.l.b16 %v1124
        %v1237 = vunpack.c.l.b16 %v1125
        %v1238 = vunpack.c.l.b16 %v1126
        %v1239 = vpack.c.b16 %v1224, %v1223
        %v1240 = vpack.c.b16 %v1226, %v1225
        %v1241 = vpack.c.b16 %v1228, %v1227
        %v1242 = vpack.c.b16 %v1230, %v1229
        %v1243 = vpack.c.b16 %v1232, %v1231
        %v1244 = vpack.c.b16 %v1234, %v1233
        %v1245 = vpack.c.b16 %v1236, %v1235
        %v1246 = vpack.c.b16 %v1238, %v1237
        %v1271 = vunpack.c.l.b16 %v1175
        %v1272 = vunpack.c.l.b16 %v1176
        %v1273 = vunpack.c.l.b16 %v1177
        %v1274 = vunpack.c.l.b16 %v1178
        %v1275 = vunpack.c.l.b16 %v1179
        %v1276 = vunpack.c.l.b16 %v1180
        %v1277 = vunpack.c.l.b16 %v1181
        %v1278 = vunpack.c.l.b16 %v1182
        %v1279 = vunpack.c.l.b16 %v1183
        %v1280 = vunpack.c.l.b16 %v1184
        %v1281 = vunpack.c.l.b16 %v1185
        %v1282 = vunpack.c.l.b16 %v1186
        %v1283 = vunpack.c.l.b16 %v1187
        %v1284 = vunpack.c.l.b16 %v1188
        %v1285 = vunpack.c.l.b16 %v1189
        %v1286 = vunpack.c.l.b16 %v1190
        %v1287 = vpack.c.b16 %v1272, %v1271
        %v1288 = vpack.c.b16 %v1274, %v1273
        %v1289 = vpack.c.b16 %v1276, %v1275
        %v1290 = vpack.c.b16 %v1278, %v1277
        %v1291 = vpack.c.b16 %v1280, %v1279
        %v1292 = vpack.c.b16 %v1282, %v1281
        %v1293 = vpack.c.b16 %v1284, %v1283
        %v1294 = vpack.c.b16 %v1286, %v1285
        %1303 = vmatpush.bf16.msra.mxu0 %v1294
        %1304 = vmatpush.bf16.msra.mxu0 %v1293
        %1305 = vmatpush.bf16.msra.mxu0 %v1292
        %1306 = vmatpush.bf16.msra.mxu0 %v1291
        %1307 = vmatpush.bf16.msra.mxu0 %v1290
        %1308 = vmatpush.bf16.msra.mxu0 %v1289
        %1309 = vmatpush.bf16.msra.mxu0 %v1288
        %1310 = vmatpush.bf16.msra.mxu0 %v1287
        %1311 = vmatmul.bf16.gmra.mxu0 %v1239
        %v1312 = vpop.f32.mrf.mxu0
        %v1313 = vadd.f32 0.0, %v1312
        %v1314 = vpop.f32.mrf.mxu0
        %v1315 = vadd.f32 0.0, %v1314
        %1316 = vmatmul.bf16.gmra.mxu0 %v1240
        %v1317 = vpop.f32.mrf.mxu0
        %v1318 = vadd.f32 0.0, %v1317
        %v1319 = vpop.f32.mrf.mxu0
        %v1320 = vadd.f32 0.0, %v1319
        %1321 = vmatmul.bf16.gmra.mxu0 %v1241
        %v1322 = vpop.f32.mrf.mxu0
        %v1323 = vadd.f32 0.0, %v1322
        %v1324 = vpop.f32.mrf.mxu0
        %v1325 = vadd.f32 0.0, %v1324
        %1326 = vmatmul.bf16.gmra.mxu0 %v1242
        %v1327 = vpop.f32.mrf.mxu0
        %v1328 = vadd.f32 0.0, %v1327
        %v1329 = vpop.f32.mrf.mxu0
        %v1330 = vadd.f32 0.0, %v1329
        %1331 = vmatmul.bf16.gmra.mxu0 %v1243
        %v1332 = vpop.f32.mrf.mxu0
        %v1333 = vadd.f32 0.0, %v1332
        %v1334 = vpop.f32.mrf.mxu0
        %v1335 = vadd.f32 0.0, %v1334
        %1336 = vmatmul.bf16.gmra.mxu0 %v1244
        %v1337 = vpop.f32.mrf.mxu0
        %v1338 = vadd.f32 0.0, %v1337
        %v1339 = vpop.f32.mrf.mxu0
        %v1340 = vadd.f32 0.0, %v1339
        %1341 = vmatmul.bf16.gmra.mxu0 %v1245
        %v1342 = vpop.f32.mrf.mxu0
        %v1343 = vadd.f32 0.0, %v1342
        %v1344 = vpop.f32.mrf.mxu0
        %v1345 = vadd.f32 0.0, %v1344
        %1346 = vmatmul.bf16.gmra.mxu0 %v1246
        %v1347 = vpop.f32.mrf.mxu0
        %v1348 = vadd.f32 0.0, %v1347
        %v1349 = vpop.f32.mrf.mxu0
        %v1350 = vadd.f32 0.0, %v1349
        %1351 = vdwg.mxu0
        %v1368 = vunpack.c.l.b16 %v1127
        %v1369 = vunpack.c.l.b16 %v1128
        %v1370 = vunpack.c.l.b16 %v1129
        %v1371 = vunpack.c.l.b16 %v1130
        %v1372 = vunpack.c.l.b16 %v1131
        %v1373 = vunpack.c.l.b16 %v1132
        %v1374 = vunpack.c.l.b16 %v1133
        %v1375 = vunpack.c.l.b16 %v1134
        %v1376 = vunpack.c.l.b16 %v1135
        %v1377 = vunpack.c.l.b16 %v1136
        %v1378 = vunpack.c.l.b16 %v1137
        %v1379 = vunpack.c.l.b16 %v1138
        %v1380 = vunpack.c.l.b16 %v1139
        %v1381 = vunpack.c.l.b16 %v1140
        %v1382 = vunpack.c.l.b16 %v1141
        %v1383 = vunpack.c.l.b16 %v1142
        %v1384 = vpack.c.b16 %v1369, %v1368
        %v1385 = vpack.c.b16 %v1371, %v1370
        %v1386 = vpack.c.b16 %v1373, %v1372
        %v1387 = vpack.c.b16 %v1375, %v1374
        %v1388 = vpack.c.b16 %v1377, %v1376
        %v1389 = vpack.c.b16 %v1379, %v1378
        %v1390 = vpack.c.b16 %v1381, %v1380
        %v1391 = vpack.c.b16 %v1383, %v1382
        %v1416 = vunpack.c.l.b16 %v1191
        %v1417 = vunpack.c.l.b16 %v1192
        %v1418 = vunpack.c.l.b16 %v1193
        %v1419 = vunpack.c.l.b16 %v1194
        %v1420 = vunpack.c.l.b16 %v1195
        %v1421 = vunpack.c.l.b16 %v1196
        %v1422 = vunpack.c.l.b16 %v1197
        %v1423 = vunpack.c.l.b16 %v1198
        %v1424 = vunpack.c.l.b16 %v1199
        %v1425 = vunpack.c.l.b16 %v1200
        %v1426 = vunpack.c.l.b16 %v1201
        %v1427 = vunpack.c.l.b16 %v1202
        %v1428 = vunpack.c.l.b16 %v1203
        %v1429 = vunpack.c.l.b16 %v1204
        %v1430 = vunpack.c.l.b16 %v1205
        %v1431 = vunpack.c.l.b16 %v1206
        %v1432 = vpack.c.b16 %v1417, %v1416
        %v1433 = vpack.c.b16 %v1419, %v1418
        %v1434 = vpack.c.b16 %v1421, %v1420
        %v1435 = vpack.c.b16 %v1423, %v1422
        %v1436 = vpack.c.b16 %v1425, %v1424
        %v1437 = vpack.c.b16 %v1427, %v1426
        %v1438 = vpack.c.b16 %v1429, %v1428
        %v1439 = vpack.c.b16 %v1431, %v1430
        %1448 = vmatpush.bf16.msra.mxu0 %v1439
        %1449 = vmatpush.bf16.msra.mxu0 %v1438
        %1450 = vmatpush.bf16.msra.mxu0 %v1437
        %1451 = vmatpush.bf16.msra.mxu0 %v1436
        %1452 = vmatpush.bf16.msra.mxu0 %v1435
        %1453 = vmatpush.bf16.msra.mxu0 %v1434
        %1454 = vmatpush.bf16.msra.mxu0 %v1433
        %1455 = vmatpush.bf16.msra.mxu0 %v1432
        %1456 = vmatmul.bf16.gmra.mxu0 %v1384
        %v1457 = vpop.f32.mrf.mxu0
        %v1458 = vadd.f32 0.0, %v1457
        %v1459 = vpop.f32.mrf.mxu0
        %v1460 = vadd.f32 0.0, %v1459
        %1461 = vmatmul.bf16.gmra.mxu0 %v1385
        %v1462 = vpop.f32.mrf.mxu0
        %v1463 = vadd.f32 0.0, %v1462
        %v1464 = vpop.f32.mrf.mxu0
        %v1465 = vadd.f32 0.0, %v1464
        %1466 = vmatmul.bf16.gmra.mxu0 %v1386
        %v1467 = vpop.f32.mrf.mxu0
        %v1468 = vadd.f32 0.0, %v1467
        %v1469 = vpop.f32.mrf.mxu0
        %v1470 = vadd.f32 0.0, %v1469
        %1471 = vmatmul.bf16.gmra.mxu0 %v1387
        %v1472 = vpop.f32.mrf.mxu0
        %v1473 = vadd.f32 0.0, %v1472
        %v1474 = vpop.f32.mrf.mxu0
        %v1475 = vadd.f32 0.0, %v1474
        %1476 = vmatmul.bf16.gmra.mxu0 %v1388
        %v1477 = vpop.f32.mrf.mxu0
        %v1478 = vadd.f32 0.0, %v1477
        %v1479 = vpop.f32.mrf.mxu0
        %v1480 = vadd.f32 0.0, %v1479
        %1481 = vmatmul.bf16.gmra.mxu0 %v1389
        %v1482 = vpop.f32.mrf.mxu0
        %v1483 = vadd.f32 0.0, %v1482
        %v1484 = vpop.f32.mrf.mxu0
        %v1485 = vadd.f32 0.0, %v1484
        %1486 = vmatmul.bf16.gmra.mxu0 %v1390
        %v1487 = vpop.f32.mrf.mxu0
        %v1488 = vadd.f32 0.0, %v1487
        %v1489 = vpop.f32.mrf.mxu0
        %v1490 = vadd.f32 0.0, %v1489
        %1491 = vmatmul.bf16.gmra.mxu0 %v1391
        %v1492 = vpop.f32.mrf.mxu0
        %v1493 = vadd.f32 0.0, %v1492
        %v1494 = vpop.f32.mrf.mxu0
        %v1495 = vadd.f32 0.0, %v1494
        %1496 = vdwg.mxu0
        %1497 = vst [vmem:[%s325] sm:$0xff] %v1313
        %1498 = vst [vmem:[%s325 + $0x8] sm:$0xff] %v1315
        %1499 = vst [vmem:[%s325 + $0x10] sm:$0xff] %v1318
        %1500 = vst [vmem:[%s325 + $0x18] sm:$0xff] %v1320
        %1501 = vst [vmem:[%s325 + $0x20] sm:$0xff] %v1323
        %1502 = vst [vmem:[%s325 + $0x28] sm:$0xff] %v1325
        %1503 = vst [vmem:[%s325 + $0x30] sm:$0xff] %v1328
        %1504 = vst [vmem:[%s325 + $0x38] sm:$0xff] %v1330
        %1505 = vst [vmem:[%s325 + $0x40] sm:$0xff] %v1333
        %1506 = vst [vmem:[%s325 + $0x48] sm:$0xff] %v1335
        %1507 = vst [vmem:[%s325 + $0x50] sm:$0xff] %v1338
        %1508 = vst [vmem:[%s325 + $0x58] sm:$0xff] %v1340
        %1509 = vst [vmem:[%s325 + $0x60] sm:$0xff] %v1343
        %1510 = vst [vmem:[%s325 + $0x68] sm:$0xff] %v1345
        %1511 = vst [vmem:[%s325 + $0x70] sm:$0xff] %v1348
        %1512 = vst [vmem:[%s325 + $0x78] sm:$0xff] %v1350
        %1513 = vst [vmem:[%s325 + $0x80] sm:$0xff] %v1458
        %1514 = vst [vmem:[%s325 + $0x88] sm:$0xff] %v1460
        %1515 = vst [vmem:[%s325 + $0x90] sm:$0xff] %v1463
        %1516 = vst [vmem:[%s325 + $0x98] sm:$0xff] %v1465
        %1517 = vst [vmem:[%s325 + $0xa0] sm:$0xff] %v1468
        %1518 = vst [vmem:[%s325 + $0xa8] sm:$0xff] %v1470
        %1519 = vst [vmem:[%s325 + $0xb0] sm:$0xff] %v1473
        %1520 = vst [vmem:[%s325 + $0xb8] sm:$0xff] %v1475
        %1521 = vst [vmem:[%s325 + $0xc0] sm:$0xff] %v1478
        %1522 = vst [vmem:[%s325 + $0xc8] sm:$0xff] %v1480
        %1523 = vst [vmem:[%s325 + $0xd0] sm:$0xff] %v1483
        %1524 = vst [vmem:[%s325 + $0xd8] sm:$0xff] %v1485
        %1525 = vst [vmem:[%s325 + $0xe0] sm:$0xff] %v1488
        %1526 = vst [vmem:[%s325 + $0xe8] sm:$0xff] %v1490
        %1527 = vst [vmem:[%s325 + $0xf0] sm:$0xff] %v1493
        %1528 = vst [vmem:[%s325 + $0xf8] sm:$0xff] %v1495
        %s1529 = sand.u32 %s130, 1
        %s1530 = scalar_lea.sflag [#allocation4], %s1529
        %s1531 = sand.u32 %s130, 1
        %s1532 = smul.addr %s1531, 256
        %s1533 = scalar_lea.vmem [#allocation8], %s1532
        %s1534 = sand.u32 %s158, 1
        %s1535 = scalar_lea.sflag [#allocation10], %s1534
        %s1536 = sand.u32 %s158, 1
        %s1537 = smul.addr %s1536, 256
        %s1538 = scalar_lea.vmem [#allocation9], %s1537
        // Predicated region
        $region45: #{tpu_custom_call.1} parent=31 // pred_check
          %p1539 = pneg %p140
        $region46: #{tpu_custom_call.1} parent=31 // pred_check_branch
          %1541 = sbr.rel (%p1539) target = $region48
        $region47: #{tpu_custom_call.1} parent=31 // pred_region
          %s1542 = smul.u32 2, %s32
          %s1543 = smul.u32 16, %s33
          %1545 = vsyncadd %s1530, 0
          %s1546 = smul.addr %s1542, 16
          %s1547 = sadd.s32 %s1543, %s1546
          %s1548 = smul.addr %s1547, 8
          %s1549 = scalar_lea.hbm %s3, %s1548
          %s1550 = sshll.u32 %s1533, 4
          %s1551 = int_to_ptr.vmem [resolvable:$true] %s1550
          %s1552 = sshll.u32 %s1549, 4
          %s1553 = int_to_ptr.hbm [resolvable:$true] %s1552
          %1558 = dma.vmem_to_hbm [thread:$0]  %s1551, 4096, %s1553, %s1530, 128, 128, 8
        $region48: #{tpu_custom_call.1} parent=31 // pred_fallthru
          _
        // Predicated region
        $region49: #{tpu_custom_call.1} parent=31 // pred_check
          %p1559 = pneg %p168
        $region50: #{tpu_custom_call.1} parent=31 // pred_check_branch
          %1561 = sbr.rel (%p1559) target = $region52
        $region51: #{tpu_custom_call.1} parent=31 // pred_region
          %s1562 = smul.u32 2, %s32
          %s1563 = smul.u32 16, %s33
          %1565 = vsyncadd %s1535, 0
          %s1566 = smul.addr %s1562, 16
          %s1567 = sadd.s32 %s1563, %s1566
          %s1568 = smul.addr %s1567, 8
          %s1569 = scalar_lea.hbm %s4, %s1568
          %s1570 = sshll.u32 %s1538, 4
          %s1571 = int_to_ptr.vmem [resolvable:$true] %s1570
          %s1572 = sshll.u32 %s1569, 4
          %s1573 = int_to_ptr.hbm [resolvable:$true] %s1572
          %1578 = dma.vmem_to_hbm [thread:$0]  %s1571, 4096, %s1573, %s1535, 128, 128, 8
        $region52: #{tpu_custom_call.1} parent=31 // pred_fallthru
          _
      $region32: #{tpu_custom_call.1} parent=5 // pred_fallthru
        _
      %p1579 = scmp.le.s32.totalorder 2, %s23
      // Predicated region
      $region53: #{tpu_custom_call.1} parent=5 // pred_check
        %p1580 = pneg %p1579
      $region54: #{tpu_custom_call.1} parent=5 // pred_check_branch
        %1582 = sbr.rel (%p1580) target = $region56
      $region55: #{tpu_custom_call.1} parent=5 // pred_region
        %s1583 = ssub.s32 %s23, 2
        // Predicated region
        $region57: #{tpu_custom_call.1} parent=55 // pred_check
          %p1584 = pneg %p146
        $region58: #{tpu_custom_call.1} parent=55 // pred_check_branch
          %1586 = sbr.rel (%p1584) target = $region60
        $region59: #{tpu_custom_call.1} parent=55 // pred_region
          %s1587 = sand.u32 %s131, 1
          %s1588 = scalar_lea.sflag [#allocation4], %s1587
          %s1589 = sand.u32 %s131, 1
          %s1590 = smul.addr %s1589, 256
          %s1591 = scalar_lea.vmem [#allocation8], %s1590
          %1593 = dma.done %s1588, 4096
        $region60: #{tpu_custom_call.1} parent=55 // pred_fallthru
          _
        // Predicated region
        $region61: #{tpu_custom_call.1} parent=55 // pred_check
          %p1594 = pneg %p174
        $region62: #{tpu_custom_call.1} parent=55 // pred_check_branch
          %1596 = sbr.rel (%p1594) target = $region64
        $region63: #{tpu_custom_call.1} parent=55 // pred_region
          %s1597 = sand.u32 %s159, 1
          %s1598 = scalar_lea.sflag [#allocation10], %s1597
          %s1599 = sand.u32 %s159, 1
          %s1600 = smul.addr %s1599, 256
          %s1601 = scalar_lea.vmem [#allocation9], %s1600
          %1603 = dma.done %s1598, 4096
        $region64: #{tpu_custom_call.1} parent=55 // pred_fallthru
          _
      $region56: #{tpu_custom_call.1} parent=5 // pred_fallthru
        _
    $region6: #{tpu_custom_call.1} parent=1 // loop_footer
      %s27 = sadd.s32 1, %s23
    $region7: #{tpu_custom_call.1} parent=1 // loop_footer_branch
      %22 = sbr.rel target = $region3
    $region8: #{tpu_custom_call.1} parent=1 // loop_exit
      _
    %1604 = vsyncpa [#allocation3], 1
    %s1605 = scalar_lea.sflag [#allocation3], 1
    %1606 = vsyncpa %s1605, 1
    %1607 = vsyncpa [#allocation6], 1
    %s1608 = scalar_lea.sflag [#allocation6], 1
    %1609 = vsyncpa %s1608, 1
    %1610 = vsyncpa [#allocation4], 1
    %s1611 = scalar_lea.sflag [#allocation4], 1
    %1612 = vsyncpa %s1611, 1
    %1613 = vsyncpa [#allocation10], 1
    %s1614 = scalar_lea.sflag [#allocation10], 1
    %1615 = vsyncpa %s1614, 1

</llo_original>
